<compile_context>
chip_gen: v6e
topology: v6e:2x2x1
jax: 0.10.0
libtpu: 0.0.40
codegen_flags: <defaults>
</compile_context>

<pallas_src>
import math

import jax
import jax.numpy as jnp
from jax.experimental import pallas as pl
from jax.experimental.pallas import tpu as pltpu

ENC_DIMS = [(28 * 28, 128), (128, 64), (64, 12), (12, 3)]
DEC_DIMS = [(3, 12), (12, 64), (64, 128), (128, 28 * 28)]
ALL_DIMS = ENC_DIMS + DEC_DIMS
N_LAYERS = len(ALL_DIMS)
D_IN = 28 * 28
BIAS_PAD = 28 * 28  # widest fout; biases packed into an (8, 784) f32 slab


def autoencoder_kernel(
    x_ref,
    w0, w1, w2, w3, w4, w5, w6, w7,   # bf16 weights, shape (fan_in, fan_out)
    b_ref,                            # (8, 784) f32 packed biases (row li)
    enc_ref, dec_ref,
):
    f32, bf16 = jnp.float32, jnp.bfloat16
    ws = (w0, w1, w2, w3, w4, w5, w6, w7)

    def linear(h_bf16, li):
        fout = ALL_DIMS[li][1]
        acc = jnp.dot(h_bf16, ws[li][...], preferred_element_type=f32)
        return acc + b_ref[li:li + 1, 0:fout]        # f32 accumulate + f32 bias

    # Single downcast of the input tile; weights already arrive as bf16.
    h = x_ref[...].astype(bf16)

    # ----- encoder -----
    h = jnp.maximum(linear(h, 0), 0.0).astype(bf16)
    h = jnp.maximum(linear(h, 1), 0.0).astype(bf16)
    h = jnp.maximum(linear(h, 2), 0.0).astype(bf16)
    enc = linear(h, 3)                               # latent: no activation
    enc_ref[...] = enc.astype(enc_ref.dtype)

    # ----- decoder -----
    h = jnp.maximum(linear(enc.astype(bf16), 4), 0.0).astype(bf16)
    h = jnp.maximum(linear(h, 5), 0.0).astype(bf16)
    h = jnp.maximum(linear(h, 6), 0.0).astype(bf16)
    dec = jax.nn.sigmoid(linear(h, 7))
    dec_ref[...] = dec.astype(dec_ref.dtype)


def init_params(key):
    """nn.Linear default init: U(-k, k), k = 1/sqrt(fan_in).

    Returns a list of (w, b) with w: (fan_in, fan_out) f32, b: (fan_out,) f32.
    """
    params = []
    for fin, fout in ALL_DIMS:
        key, kw, kb = jax.random.split(key, 3)
        bound = 1.0 / math.sqrt(fin)
        w = jax.random.uniform(kw, (fin, fout), jnp.float32, -bound, bound)
        b = jax.random.uniform(kb, (fout,), jnp.float32, -bound, bound)
        params.append((w, b))
    return params


def _pack_biases(params):
    rows = [jnp.pad(b, (0, BIAS_PAD - b.shape[0])) for _, b in params]
    return jnp.stack(rows, axis=0)  # (8, 784) f32


def _pick_tb(B, max_tb=512):
    """Largest batch tile <= max_tb: B itself if small, else a multiple-of-8
    divisor of B (block second-to-last dim must be full-dim or %8)."""
    if B <= max_tb:
        return B
    for cand in range(max_tb - max_tb % 8, 7, -8):
        if B % cand == 0:
            return cand
    return B  # fallback: single tile


def autoencoder_forward(x, params, *, tb=None):
    B, D = x.shape
    assert D == D_IN
    if tb is None:
        tb = _pick_tb(B)
    assert B % tb == 0

    weights_bf16 = [w.astype(jnp.bfloat16) for w, _ in params]
    bias_pack = _pack_biases(params)

    in_specs = [pl.BlockSpec((tb, D), lambda i: (i, 0))]          # x tile
    for fin, fout in ALL_DIMS:
        in_specs.append(pl.BlockSpec((fin, fout), lambda i: (0, 0)))  # weight (full)
    in_specs.append(pl.BlockSpec((N_LAYERS, BIAS_PAD), lambda i: (0, 0)))  # biases

    out_specs = [
        pl.BlockSpec((tb, 3), lambda i: (i, 0)),       # encoded
        pl.BlockSpec((tb, D), lambda i: (i, 0)),       # decoded
    ]
    out_shape = (
        jax.ShapeDtypeStruct((B, 3), jnp.float32),
        jax.ShapeDtypeStruct((B, D), jnp.float32),
    )

    return pl.pallas_call(
        autoencoder_kernel,
        out_shape=out_shape,
        grid_spec=pltpu.PrefetchScalarGridSpec(
            num_scalar_prefetch=0,
            grid=(B // tb,),
            in_specs=in_specs,
            out_specs=out_specs,
        ),
        compiler_params=pltpu.CompilerParams(
            dimension_semantics=("parallel",),
            vmem_limit_bytes=32 * 1024 * 1024,
        ),
    )(x, *weights_bf16, bias_pack)


def reference_forward_f32(x, params):
    """Pure-f32 JAX reference (original PyTorch semantics)."""
    h = x
    enc = dec = None
    for li, (w, b) in enumerate(params):
        h = h @ w + b
        if li == 3:
            enc = h
        elif li == 7:
            dec = jax.nn.sigmoid(h)
        else:
            h = jnp.maximum(h, 0.0)
    return enc, dec


def reference_forward_bf16(x, params):
    """Pure-JAX reference matching the kernel's bf16-in / f32-accumulate math."""
    bf16, f32 = jnp.bfloat16, jnp.float32
    h = x.astype(bf16)
    enc = dec = None
    for li, (w, b) in enumerate(params):
        acc = jnp.dot(h, w.astype(bf16), preferred_element_type=f32) + b
        if li == 3:
            enc = acc
            h = acc.astype(bf16)
        elif li == 7:
            dec = jax.nn.sigmoid(acc)
        else:
            h = jnp.maximum(acc, 0.0).astype(bf16)
    return enc, dec


if __name__ == "__main__":
    key = jax.random.PRNGKey(0)
    kp, kx = jax.random.split(key)

    params = init_params(kp)

    B = 16  # small demo batch -> tb = B, grid = (1,)
    x = jax.random.uniform(kx, (B, D_IN), jnp.float32)

    enc, dec = autoencoder_forward(x, params)
    jax.block_until_ready((enc, dec))

    enc_bf, dec_bf = reference_forward_bf16(x, params)
    enc_f32, dec_f32 = reference_forward_f32(x, params)

    assert enc.shape == (B, 3) and dec.shape == (B, D_IN)
    # Tight check vs. a reference using identical bf16-matmul / f32-accum math.
    assert jnp.allclose(enc, enc_bf, rtol=1e-3, atol=1e-3)
    assert jnp.allclose(dec, dec_bf, rtol=1e-3, atol=1e-3)
    # Loose sanity check vs. the original f32 semantics (bf16 quantization).
    assert jnp.allclose(enc, enc_f32, rtol=5e-2, atol=5e-2)
    assert jnp.allclose(dec, dec_f32, rtol=5e-2, atol=5e-2)

    print("KERNEL_OK")
</pallas_src>

<mosaic_0001>
module attributes {stable_mosaic.version = 11 : i64} {
  func.func @autoencoder_kernel(%arg0: i32, %arg1: memref<16x784xf32, #tpu.memory_space<vmem>>, %arg2: memref<784x128xbf16, #tpu.memory_space<vmem>>, %arg3: memref<128x64xbf16, #tpu.memory_space<vmem>>, %arg4: memref<64x12xbf16, #tpu.memory_space<vmem>>, %arg5: memref<12x3xbf16, #tpu.memory_space<vmem>>, %arg6: memref<3x12xbf16, #tpu.memory_space<vmem>>, %arg7: memref<12x64xbf16, #tpu.memory_space<vmem>>, %arg8: memref<64x128xbf16, #tpu.memory_space<vmem>>, %arg9: memref<128x784xbf16, #tpu.memory_space<vmem>>, %arg10: memref<8x784xf32, #tpu.memory_space<vmem>>, %arg11: memref<16x3xf32, #tpu.memory_space<vmem>>, %arg12: memref<16x784xf32, #tpu.memory_space<vmem>>) attributes {dimension_semantics = [#tpu.dimension_semantics<parallel>], iteration_bounds = array<i64: 1>, scalar_prefetch = 0 : i64, scratch_operands = 0 : i64, tpu.core_type = #tpu.core_type<tc>, window_params = [{transform_indices = @transform_0, window_bounds = array<i64: 16, 784>}, {pipeline_mode = #tpu.pipeline_mode<synchronous>, transform_indices = @transform_1, window_bounds = array<i64: 784, 128>}, {pipeline_mode = #tpu.pipeline_mode<synchronous>, transform_indices = @transform_2, window_bounds = array<i64: 128, 64>}, {pipeline_mode = #tpu.pipeline_mode<synchronous>, transform_indices = @transform_3, window_bounds = array<i64: 64, 12>}, {pipeline_mode = #tpu.pipeline_mode<synchronous>, transform_indices = @transform_4, window_bounds = array<i64: 12, 3>}, {pipeline_mode = #tpu.pipeline_mode<synchronous>, transform_indices = @transform_5, window_bounds = array<i64: 3, 12>}, {pipeline_mode = #tpu.pipeline_mode<synchronous>, transform_indices = @transform_6, window_bounds = array<i64: 12, 64>}, {pipeline_mode = #tpu.pipeline_mode<synchronous>, transform_indices = @transform_7, window_bounds = array<i64: 64, 128>}, {pipeline_mode = #tpu.pipeline_mode<synchronous>, transform_indices = @transform_8, window_bounds = array<i64: 128, 784>}, {pipeline_mode = #tpu.pipeline_mode<synchronous>, transform_indices = @transform_9, window_bounds = array<i64: 8, 784>}, {transform_indices = @transform_10, window_bounds = array<i64: 16, 3>}, {transform_indices = @transform_11, window_bounds = array<i64: 16, 784>}]} {
    %c0 = arith.constant 0 : index
    %c0_0 = arith.constant 0 : index
    %0 = vector.load %arg1[%c0, %c0_0] : memref<16x784xf32, #tpu.memory_space<vmem>>, vector<16x784xf32>
    %1 = arith.truncf %0 : vector<16x784xf32> to vector<16x784xbf16>
    %c0_1 = arith.constant 0 : index
    %c0_2 = arith.constant 0 : index
    %2 = vector.load %arg2[%c0_1, %c0_2] : memref<784x128xbf16, #tpu.memory_space<vmem>>, vector<784x128xbf16>
    %cst = arith.constant dense<0.000000e+00> : vector<16x128xf32>
    %3 = tpu.matmul %1, %2, %cst {dimension_numbers = #tpu.dot_dimension_numbers<[1], [0], [0], [1], [0, 0, 1, 1], [], []>} : vector<16x784xbf16>, vector<784x128xbf16>, vector<16x128xf32> -> vector<16x128xf32>
    %c0_3 = arith.constant 0 : index
    %c0_4 = arith.constant 0 : index
    %4 = vector.load %arg10[%c0_3, %c0_4] : memref<8x784xf32, #tpu.memory_space<vmem>>, vector<1x128xf32>
    %5 = vector.broadcast %4 : vector<1x128xf32> to vector<16x128xf32>
    %6 = arith.addf %3, %5 : vector<16x128xf32>
    %cst_5 = arith.constant 0.000000e+00 : f32
    %7 = vector.broadcast %cst_5 : f32 to vector<16x128xf32>
    %8 = arith.maximumf %6, %7 : vector<16x128xf32>
    %9 = arith.truncf %8 : vector<16x128xf32> to vector<16x128xbf16>
    %c0_6 = arith.constant 0 : index
    %c0_7 = arith.constant 0 : index
    %10 = vector.load %arg3[%c0_6, %c0_7] : memref<128x64xbf16, #tpu.memory_space<vmem>>, vector<128x64xbf16>
    %cst_8 = arith.constant dense<0.000000e+00> : vector<16x64xf32>
    %11 = tpu.matmul %9, %10, %cst_8 {dimension_numbers = #tpu.dot_dimension_numbers<[1], [0], [0], [1], [0, 0, 1, 1], [], []>} : vector<16x128xbf16>, vector<128x64xbf16>, vector<16x64xf32> -> vector<16x64xf32>
    %c1 = arith.constant 1 : index
    %c0_9 = arith.constant 0 : index
    %12 = vector.load %arg10[%c1, %c0_9] : memref<8x784xf32, #tpu.memory_space<vmem>>, vector<1x64xf32>
    %13 = vector.broadcast %12 : vector<1x64xf32> to vector<16x64xf32>
    %14 = arith.addf %11, %13 : vector<16x64xf32>
    %cst_10 = arith.constant 0.000000e+00 : f32
    %15 = vector.broadcast %cst_10 : f32 to vector<16x64xf32>
    %16 = arith.maximumf %14, %15 : vector<16x64xf32>
    %17 = arith.truncf %16 : vector<16x64xf32> to vector<16x64xbf16>
    %c0_11 = arith.constant 0 : index
    %c0_12 = arith.constant 0 : index
    %18 = vector.load %arg4[%c0_11, %c0_12] : memref<64x12xbf16, #tpu.memory_space<vmem>>, vector<64x12xbf16>
    %cst_13 = arith.constant dense<0.000000e+00> : vector<16x12xf32>
    %19 = tpu.matmul %17, %18, %cst_13 {dimension_numbers = #tpu.dot_dimension_numbers<[1], [0], [0], [1], [0, 0, 1, 1], [], []>} : vector<16x64xbf16>, vector<64x12xbf16>, vector<16x12xf32> -> vector<16x12xf32>
    %c2 = arith.constant 2 : index
    %c0_14 = arith.constant 0 : index
    %20 = vector.load %arg10[%c2, %c0_14] : memref<8x784xf32, #tpu.memory_space<vmem>>, vector<1x12xf32>
    %21 = vector.broadcast %20 : vector<1x12xf32> to vector<16x12xf32>
    %22 = arith.addf %19, %21 : vector<16x12xf32>
    %cst_15 = arith.constant 0.000000e+00 : f32
    %23 = vector.broadcast %cst_15 : f32 to vector<16x12xf32>
    %24 = arith.maximumf %22, %23 : vector<16x12xf32>
    %25 = arith.truncf %24 : vector<16x12xf32> to vector<16x12xbf16>
    %c0_16 = arith.constant 0 : index
    %c0_17 = arith.constant 0 : index
    %26 = vector.load %arg5[%c0_16, %c0_17] : memref<12x3xbf16, #tpu.memory_space<vmem>>, vector<12x3xbf16>
    %cst_18 = arith.constant dense<0.000000e+00> : vector<16x3xf32>
    %27 = tpu.matmul %25, %26, %cst_18 {dimension_numbers = #tpu.dot_dimension_numbers<[1], [0], [0], [1], [0, 0, 1, 1], [], []>} : vector<16x12xbf16>, vector<12x3xbf16>, vector<16x3xf32> -> vector<16x3xf32>
    %c3 = arith.constant 3 : index
    %c0_19 = arith.constant 0 : index
    %28 = vector.load %arg10[%c3, %c0_19] : memref<8x784xf32, #tpu.memory_space<vmem>>, vector<1x3xf32>
    %29 = vector.broadcast %28 : vector<1x3xf32> to vector<16x3xf32>
    %30 = arith.addf %27, %29 : vector<16x3xf32>
    %c0_20 = arith.constant 0 : index
    %c0_21 = arith.constant 0 : index
    %31 = vector.load %arg11[%c0_20, %c0_21] : memref<16x3xf32, #tpu.memory_space<vmem>>, vector<16x3xf32>
    tpu.vector_store %arg11[%c0_20, %c0_21], %30 {strides = array<i32>} : memref<16x3xf32, #tpu.memory_space<vmem>>, vector<16x3xf32>,
    %32 = arith.truncf %30 : vector<16x3xf32> to vector<16x3xbf16>
    %c0_22 = arith.constant 0 : index
    %c0_23 = arith.constant 0 : index
    %33 = vector.load %arg6[%c0_22, %c0_23] : memref<3x12xbf16, #tpu.memory_space<vmem>>, vector<3x12xbf16>
    %cst_24 = arith.constant dense<0.000000e+00> : vector<16x12xf32>
    %34 = tpu.matmul %32, %33, %cst_24 {dimension_numbers = #tpu.dot_dimension_numbers<[1], [0], [0], [1], [0, 0, 1, 1], [], []>} : vector<16x3xbf16>, vector<3x12xbf16>, vector<16x12xf32> -> vector<16x12xf32>
    %c4 = arith.constant 4 : index
    %c0_25 = arith.constant 0 : index
    %35 = vector.load %arg10[%c4, %c0_25] : memref<8x784xf32, #tpu.memory_space<vmem>>, vector<1x12xf32>
    %36 = vector.broadcast %35 : vector<1x12xf32> to vector<16x12xf32>
    %37 = arith.addf %34, %36 : vector<16x12xf32>
    %cst_26 = arith.constant 0.000000e+00 : f32
    %38 = vector.broadcast %cst_26 : f32 to vector<16x12xf32>
    %39 = arith.maximumf %37, %38 : vector<16x12xf32>
    %40 = arith.truncf %39 : vector<16x12xf32> to vector<16x12xbf16>
    %c0_27 = arith.constant 0 : index
    %c0_28 = arith.constant 0 : index
    %41 = vector.load %arg7[%c0_27, %c0_28] : memref<12x64xbf16, #tpu.memory_space<vmem>>, vector<12x64xbf16>
    %cst_29 = arith.constant dense<0.000000e+00> : vector<16x64xf32>
    %42 = tpu.matmul %40, %41, %cst_29 {dimension_numbers = #tpu.dot_dimension_numbers<[1], [0], [0], [1], [0, 0, 1, 1], [], []>} : vector<16x12xbf16>, vector<12x64xbf16>, vector<16x64xf32> -> vector<16x64xf32>
    %c5 = arith.constant 5 : index
    %c0_30 = arith.constant 0 : index
    %43 = vector.load %arg10[%c5, %c0_30] : memref<8x784xf32, #tpu.memory_space<vmem>>, vector<1x64xf32>
    %44 = vector.broadcast %43 : vector<1x64xf32> to vector<16x64xf32>
    %45 = arith.addf %42, %44 : vector<16x64xf32>
    %cst_31 = arith.constant 0.000000e+00 : f32
    %46 = vector.broadcast %cst_31 : f32 to vector<16x64xf32>
    %47 = arith.maximumf %45, %46 : vector<16x64xf32>
    %48 = arith.truncf %47 : vector<16x64xf32> to vector<16x64xbf16>
    %c0_32 = arith.constant 0 : index
    %c0_33 = arith.constant 0 : index
    %49 = vector.load %arg8[%c0_32, %c0_33] : memref<64x128xbf16, #tpu.memory_space<vmem>>, vector<64x128xbf16>
    %cst_34 = arith.constant dense<0.000000e+00> : vector<16x128xf32>
    %50 = tpu.matmul %48, %49, %cst_34 {dimension_numbers = #tpu.dot_dimension_numbers<[1], [0], [0], [1], [0, 0, 1, 1], [], []>} : vector<16x64xbf16>, vector<64x128xbf16>, vector<16x128xf32> -> vector<16x128xf32>
    %c6 = arith.constant 6 : index
    %c0_35 = arith.constant 0 : index
    %51 = vector.load %arg10[%c6, %c0_35] : memref<8x784xf32, #tpu.memory_space<vmem>>, vector<1x128xf32>
    %52 = vector.broadcast %51 : vector<1x128xf32> to vector<16x128xf32>
    %53 = arith.addf %50, %52 : vector<16x128xf32>
    %cst_36 = arith.constant 0.000000e+00 : f32
    %54 = vector.broadcast %cst_36 : f32 to vector<16x128xf32>
    %55 = arith.maximumf %53, %54 : vector<16x128xf32>
    %56 = arith.truncf %55 : vector<16x128xf32> to vector<16x128xbf16>
    %c0_37 = arith.constant 0 : index
    %c0_38 = arith.constant 0 : index
    %57 = vector.load %arg9[%c0_37, %c0_38] : memref<128x784xbf16, #tpu.memory_space<vmem>>, vector<128x784xbf16>
    %cst_39 = arith.constant dense<0.000000e+00> : vector<16x784xf32>
    %58 = tpu.matmul %56, %57, %cst_39 {dimension_numbers = #tpu.dot_dimension_numbers<[1], [0], [0], [1], [0, 0, 1, 1], [], []>} : vector<16x128xbf16>, vector<128x784xbf16>, vector<16x784xf32> -> vector<16x784xf32>
    %c7 = arith.constant 7 : index
    %c0_40 = arith.constant 0 : index
    %59 = vector.load %arg10[%c7, %c0_40] : memref<8x784xf32, #tpu.memory_space<vmem>>, vector<1x784xf32>
    %60 = vector.broadcast %59 : vector<1x784xf32> to vector<16x784xf32>
    %61 = arith.addf %58, %60 : vector<16x784xf32>
    %62 = arith.negf %61 : vector<16x784xf32>
    %63 = math.exp %62 : vector<16x784xf32>
    %cst_41 = arith.constant 1.000000e+00 : f32
    %64 = vector.broadcast %cst_41 : f32 to vector<16x784xf32>
    %65 = arith.addf %64, %63 : vector<16x784xf32>
    %66 = arith.divf %64, %65 : vector<16x784xf32>
    %c0_42 = arith.constant 0 : index
    %c0_43 = arith.constant 0 : index
    %67 = vector.load %arg12[%c0_42, %c0_43] : memref<16x784xf32, #tpu.memory_space<vmem>>, vector<16x784xf32>
    tpu.vector_store %arg12[%c0_42, %c0_43], %66 {strides = array<i32>} : memref<16x784xf32, #tpu.memory_space<vmem>>, vector<16x784xf32>,
    return
  }
  func.func @transform_0(%arg0: i32) -> (i32, i32) {
    %c0_i32 = arith.constant 0 : i32
    %c0_i32_0 = arith.constant 0 : i32
    return %arg0, %c0_i32 : i32, i32
  }
  func.func @transform_1(%arg0: i32) -> (i32, i32) {
    %c0_i32 = arith.constant 0 : i32
    %c0_i32_0 = arith.constant 0 : i32
    %c0_i32_1 = arith.constant 0 : i32
    return %c0_i32, %c0_i32_0 : i32, i32
  }
  func.func @transform_2(%arg0: i32) -> (i32, i32) {
    %c0_i32 = arith.constant 0 : i32
    %c0_i32_0 = arith.constant 0 : i32
    %c0_i32_1 = arith.constant 0 : i32
    return %c0_i32, %c0_i32_0 : i32, i32
  }
  func.func @transform_3(%arg0: i32) -> (i32, i32) {
    %c0_i32 = arith.constant 0 : i32
    %c0_i32_0 = arith.constant 0 : i32
    %c0_i32_1 = arith.constant 0 : i32
    return %c0_i32, %c0_i32_0 : i32, i32
  }
  func.func @transform_4(%arg0: i32) -> (i32, i32) {
    %c0_i32 = arith.constant 0 : i32
    %c0_i32_0 = arith.constant 0 : i32
    %c0_i32_1 = arith.constant 0 : i32
    return %c0_i32, %c0_i32_0 : i32, i32
  }
  func.func @transform_5(%arg0: i32) -> (i32, i32) {
    %c0_i32 = arith.constant 0 : i32
    %c0_i32_0 = arith.constant 0 : i32
    %c0_i32_1 = arith.constant 0 : i32
    return %c0_i32, %c0_i32_0 : i32, i32
  }
  func.func @transform_6(%arg0: i32) -> (i32, i32) {
    %c0_i32 = arith.constant 0 : i32
    %c0_i32_0 = arith.constant 0 : i32
    %c0_i32_1 = arith.constant 0 : i32
    return %c0_i32, %c0_i32_0 : i32, i32
  }
  func.func @transform_7(%arg0: i32) -> (i32, i32) {
    %c0_i32 = arith.constant 0 : i32
    %c0_i32_0 = arith.constant 0 : i32
    %c0_i32_1 = arith.constant 0 : i32
    return %c0_i32, %c0_i32_0 : i32, i32
  }
  func.func @transform_8(%arg0: i32) -> (i32, i32) {
    %c0_i32 = arith.constant 0 : i32
    %c0_i32_0 = arith.constant 0 : i32
    %c0_i32_1 = arith.constant 0 : i32
    return %c0_i32, %c0_i32_0 : i32, i32
  }
  func.func @transform_9(%arg0: i32) -> (i32, i32) {
    %c0_i32 = arith.constant 0 : i32
    %c0_i32_0 = arith.constant 0 : i32
    %c0_i32_1 = arith.constant 0 : i32
    return %c0_i32, %c0_i32_0 : i32, i32
  }
  func.func @transform_10(%arg0: i32) -> (i32, i32) {
    %c0_i32 = arith.constant 0 : i32
    %c0_i32_0 = arith.constant 0 : i32
    return %arg0, %c0_i32 : i32, i32
  }
  func.func @transform_11(%arg0: i32) -> (i32, i32) {
    %c0_i32 = arith.constant 0 : i32
    %c0_i32_0 = arith.constant 0 : i32
    return %arg0, %c0_i32 : i32, i32
  }
}

</mosaic_0001>

<llo_original>
// kernel: tpu_custom_call.1
$region0: #{tpu_custom_call.1}
  #allocation0 [shape = 'u32[]', space=smem, size = 0x4, offset = 0x4, fixed_abs, tag = 'smem constant byte address 0x4 - core index']
  #allocation1 [shape = 'u32[144,128]{1,0:T(1,128)}', space=vmem, size = 0x12000, scoped, tag = 'internal scratch']
  %s0 = inlined_call_operand.vmem [shape: f32[16,784], index: 0, kind: input, shape index: {}]
  %s1 = inlined_call_operand.vmem [shape: bf16[784,128], index: 1, kind: input, shape index: {}]
  %s2 = inlined_call_operand.vmem [shape: bf16[128,64], index: 2, kind: input, shape index: {}]
  %s3 = inlined_call_operand.vmem [shape: bf16[64,12], index: 3, kind: input, shape index: {}]
  %s4 = inlined_call_operand.vmem [shape: bf16[12,3], index: 4, kind: input, shape index: {}]
  %s5 = inlined_call_operand.vmem [shape: bf16[3,12], index: 5, kind: input, shape index: {}]
  %s6 = inlined_call_operand.vmem [shape: bf16[12,64], index: 6, kind: input, shape index: {}]
  %s7 = inlined_call_operand.vmem [shape: bf16[64,128], index: 7, kind: input, shape index: {}]
  %s8 = inlined_call_operand.vmem [shape: bf16[128,784], index: 8, kind: input, shape index: {}]
  %s9 = inlined_call_operand.vmem [shape: f32[8,784], index: 9, kind: input, shape index: {}]
  %s10 = inlined_call_operand.vmem [shape: f32[16,3], index: 10, kind: output, shape index: {0}]
  %s11 = inlined_call_operand.hbm [shape: f32[16,784], index: 11, kind: output, shape index: {1}]
  %12 = xla_tuple %s10, %s11
  %s13 = sld [smem:[#allocation0]]
  $region58: #{tpu_custom_call.1} parent=0
    _
  %s15 = ssub.s32 1, %s13
  %s16 = scalar_select 0, %s15, %s13
  $region1: #{tpu_custom_call.1} parent=0
    #allocation2 [shape = 'u8[57344]{0}', space=vmem, size = 0xe000, scoped, tag = 'output window, operand 1, single buffered']
    #allocation3 [shape = 's32[1]{0}', space=sflag, size = 0x4, scoped, tag = 'scoped memory for tpu_custom_call.1']
    %17 = vsyncpa [#allocation3], 0
    // Predicated region
    $region2: #{tpu_custom_call.1} parent=1 // pred_check
      _
    $region3: #{tpu_custom_call.1} parent=1 // pred_check_branch
      %19 = sbr.rel (0) target = $region5
    $region4: #{tpu_custom_call.1} parent=1 // pred_region
      _
    $region5: #{tpu_custom_call.1} parent=1 // pred_fallthru
      _
    // Predicated region
    $region6: #{tpu_custom_call.1} parent=1 // pred_check
      _
    $region7: #{tpu_custom_call.1} parent=1 // pred_check_branch
      %21 = sbr.rel (0) target = $region9
    $region8: #{tpu_custom_call.1} parent=1 // pred_region
      _
    $region9: #{tpu_custom_call.1} parent=1 // pred_fallthru
      _
    // Predicated region
    $region10: #{tpu_custom_call.1} parent=1 // pred_check
      _
    $region11: #{tpu_custom_call.1} parent=1 // pred_check_branch
      %23 = sbr.rel (0) target = $region13
    $region12: #{tpu_custom_call.1} parent=1 // pred_region
      _
    $region13: #{tpu_custom_call.1} parent=1 // pred_fallthru
      _
    // Predicated region
    $region14: #{tpu_custom_call.1} parent=1 // pred_check
      _
    $region15: #{tpu_custom_call.1} parent=1 // pred_check_branch
      %25 = sbr.rel (0) target = $region17
    $region16: #{tpu_custom_call.1} parent=1 // pred_region
      _
    $region17: #{tpu_custom_call.1} parent=1 // pred_fallthru
      _
    // Predicated region
    $region18: #{tpu_custom_call.1} parent=1 // pred_check
      _
    $region19: #{tpu_custom_call.1} parent=1 // pred_check_branch
      %27 = sbr.rel (0) target = $region21
    $region20: #{tpu_custom_call.1} parent=1 // pred_region
      _
    $region21: #{tpu_custom_call.1} parent=1 // pred_fallthru
      _
    // Predicated region
    $region22: #{tpu_custom_call.1} parent=1 // pred_check
      _
    $region23: #{tpu_custom_call.1} parent=1 // pred_check_branch
      %29 = sbr.rel (0) target = $region25
    $region24: #{tpu_custom_call.1} parent=1 // pred_region
      _
    $region25: #{tpu_custom_call.1} parent=1 // pred_fallthru
      _
    // Predicated region
    $region26: #{tpu_custom_call.1} parent=1 // pred_check
      _
    $region27: #{tpu_custom_call.1} parent=1 // pred_check_branch
      %31 = sbr.rel (0) target = $region29
    $region28: #{tpu_custom_call.1} parent=1 // pred_region
      _
    $region29: #{tpu_custom_call.1} parent=1 // pred_fallthru
      _
    // Predicated region
    $region30: #{tpu_custom_call.1} parent=1 // pred_check
      _
    $region31: #{tpu_custom_call.1} parent=1 // pred_check_branch
      %33 = sbr.rel (0) target = $region33
    $region32: #{tpu_custom_call.1} parent=1 // pred_region
      _
    $region33: #{tpu_custom_call.1} parent=1 // pred_fallthru
      _
    // Predicated region
    $region34: #{tpu_custom_call.1} parent=1 // pred_check
      _
    $region35: #{tpu_custom_call.1} parent=1 // pred_check_branch
      %35 = sbr.rel (0) target = $region37
    $region36: #{tpu_custom_call.1} parent=1 // pred_region
      _
    $region37: #{tpu_custom_call.1} parent=1 // pred_fallthru
      _
    // Predicated region
    $region38: #{tpu_custom_call.1} parent=1 // pred_check
      _
    $region39: #{tpu_custom_call.1} parent=1 // pred_check_branch
      %37 = sbr.rel (0) target = $region41
    $region40: #{tpu_custom_call.1} parent=1 // pred_region
      _
    $region41: #{tpu_custom_call.1} parent=1 // pred_fallthru
      _
    %v39 = vld [vmem:[%s0] sm:$0xff]
    %v40 = vld [vmem:[%s0 + $0x8] sm:$0xff]
    %v41 = vld [vmem:[%s0 + $0x10] sm:$0xff]
    %v42 = vld [vmem:[%s0 + $0x18] sm:$0xff]
    %v43 = vld [vmem:[%s0 + $0x20] sm:$0xff]
    %v44 = vld [vmem:[%s0 + $0x28] sm:$0xff]
    %v45 = vld [vmem:[%s0 + $0x30] sm:$0xff]
    %v46 = vld [vmem:[%s0 + $0x38] sm:$0xff]
    %v47 = vld [vmem:[%s0 + $0x40] sm:$0xff]
    %v48 = vld [vmem:[%s0 + $0x48] sm:$0xff]
    %v49 = vld [vmem:[%s0 + $0x50] sm:$0xff]
    %v50 = vld [vmem:[%s0 + $0x58] sm:$0xff]
    %v51 = vld [vmem:[%s0 + $0x60] sm:$0xff]
    %v52 = vld [vmem:[%s0 + $0x68] sm:$0xff]
    %v53 = vpack.c.bf16 %v46, %v39
    %v54 = vpack.c.bf16 %v47, %v40
    %v55 = vpack.c.bf16 %v48, %v41
    %v56 = vpack.c.bf16 %v49, %v42
    %v57 = vpack.c.bf16 %v50, %v43
    %v58 = vpack.c.bf16 %v51, %v44
    %v59 = vpack.c.bf16 %v52, %v45
    %v60 = vld [vmem:[%s1] sm:$0xf]
    %v61 = vld [vmem:[%s1 + $0x4] sm:$0xf]
    %v62 = vld [vmem:[%s1 + $0x8] sm:$0xf]
    %v63 = vld [vmem:[%s1 + $0xc] sm:$0xf]
    %v64 = vld [vmem:[%s1 + $0x10] sm:$0xf]
    %v65 = vld [vmem:[%s1 + $0x14] sm:$0xf]
    %v66 = vld [vmem:[%s1 + $0x18] sm:$0xf]
    %v67 = vld [vmem:[%s1 + $0x1c] sm:$0xf]
    %v68 = vld [vmem:[%s1 + $0x20] sm:$0xf]
    %v69 = vld [vmem:[%s1 + $0x24] sm:$0xf]
    %v70 = vld [vmem:[%s1 + $0x28] sm:$0xf]
    %v71 = vld [vmem:[%s1 + $0x2c] sm:$0xf]
    %v72 = vld [vmem:[%s1 + $0x30] sm:$0xf]
    %v73 = vld [vmem:[%s1 + $0x34] sm:$0xf]
    %v74 = vld [vmem:[%s1 + $0x38] sm:$0xf]
    %v75 = vld [vmem:[%s1 + $0x3c] sm:$0xf]
    %v76 = vld [vmem:[%s1 + $0x40] sm:$0xf]
    %v77 = vld [vmem:[%s1 + $0x44] sm:$0xf]
    %v78 = vld [vmem:[%s1 + $0x48] sm:$0xf]
    %v79 = vld [vmem:[%s1 + $0x4c] sm:$0xf]
    %v80 = vld [vmem:[%s1 + $0x50] sm:$0xf]
    %v81 = vld [vmem:[%s1 + $0x54] sm:$0xf]
    %v82 = vld [vmem:[%s1 + $0x58] sm:$0xf]
    %v83 = vld [vmem:[%s1 + $0x5c] sm:$0xf]
    %v84 = vld [vmem:[%s1 + $0x60] sm:$0xf]
    %v85 = vld [vmem:[%s1 + $0x64] sm:$0xf]
    %v86 = vld [vmem:[%s1 + $0x68] sm:$0xf]
    %v87 = vld [vmem:[%s1 + $0x6c] sm:$0xf]
    %v88 = vld [vmem:[%s1 + $0x70] sm:$0xf]
    %v89 = vld [vmem:[%s1 + $0x74] sm:$0xf]
    %v90 = vld [vmem:[%s1 + $0x78] sm:$0xf]
    %v91 = vld [vmem:[%s1 + $0x7c] sm:$0xf]
    %v92 = vld [vmem:[%s1 + $0x80] sm:$0xf]
    %v93 = vld [vmem:[%s1 + $0x84] sm:$0xf]
    %v94 = vld [vmem:[%s1 + $0x88] sm:$0xf]
    %v95 = vld [vmem:[%s1 + $0x8c] sm:$0xf]
    %v96 = vld [vmem:[%s1 + $0x90] sm:$0xf]
    %v97 = vld [vmem:[%s1 + $0x94] sm:$0xf]
    %v98 = vld [vmem:[%s1 + $0x98] sm:$0xf]
    %v99 = vld [vmem:[%s1 + $0x9c] sm:$0xf]
    %v100 = vld [vmem:[%s1 + $0xa0] sm:$0xf]
    %v101 = vld [vmem:[%s1 + $0xa4] sm:$0xf]
    %v102 = vld [vmem:[%s1 + $0xa8] sm:$0xf]
    %v103 = vld [vmem:[%s1 + $0xac] sm:$0xf]
    %v104 = vld [vmem:[%s1 + $0xb0] sm:$0xf]
    %v105 = vld [vmem:[%s1 + $0xb4] sm:$0xf]
    %v106 = vld [vmem:[%s1 + $0xb8] sm:$0xf]
    %v107 = vld [vmem:[%s1 + $0xbc] sm:$0xf]
    %v108 = vld [vmem:[%s1 + $0xc0] sm:$0xf]
    %v109 = vld [vmem:[%s1 + $0xc4] sm:$0xf]
    %v110 = vld [vmem:[%s1 + $0xc8] sm:$0xf]
    %v111 = vld [vmem:[%s1 + $0xcc] sm:$0xf]
    %v112 = vld [vmem:[%s1 + $0xd0] sm:$0xf]
    %v113 = vld [vmem:[%s1 + $0xd4] sm:$0xf]
    %v114 = vld [vmem:[%s1 + $0xd8] sm:$0xf]
    %v115 = vld [vmem:[%s1 + $0xdc] sm:$0xf]
    %v116 = vld [vmem:[%s1 + $0xe0] sm:$0xf]
    %v117 = vld [vmem:[%s1 + $0xe4] sm:$0xf]
    %v118 = vld [vmem:[%s1 + $0xe8] sm:$0xf]
    %v119 = vld [vmem:[%s1 + $0xec] sm:$0xf]
    %v120 = vld [vmem:[%s1 + $0xf0] sm:$0xf]
    %v121 = vld [vmem:[%s1 + $0xf4] sm:$0xf]
    %v122 = vld [vmem:[%s1 + $0xf8] sm:$0xf]
    %v123 = vld [vmem:[%s1 + $0xfc] sm:$0xf]
    %v124 = vld [vmem:[%s1 + $0x100] sm:$0xf]
    %v125 = vld [vmem:[%s1 + $0x104] sm:$0xf]
    %v126 = vld [vmem:[%s1 + $0x108] sm:$0xf]
    %v127 = vld [vmem:[%s1 + $0x10c] sm:$0xf]
    %v128 = vld [vmem:[%s1 + $0x110] sm:$0xf]
    %v129 = vld [vmem:[%s1 + $0x114] sm:$0xf]
    %v130 = vld [vmem:[%s1 + $0x118] sm:$0xf]
    %v131 = vld [vmem:[%s1 + $0x11c] sm:$0xf]
    %v132 = vld [vmem:[%s1 + $0x120] sm:$0xf]
    %v133 = vld [vmem:[%s1 + $0x124] sm:$0xf]
    %v134 = vld [vmem:[%s1 + $0x128] sm:$0xf]
    %v135 = vld [vmem:[%s1 + $0x12c] sm:$0xf]
    %v136 = vld [vmem:[%s1 + $0x130] sm:$0xf]
    %v137 = vld [vmem:[%s1 + $0x134] sm:$0xf]
    %v138 = vld [vmem:[%s1 + $0x138] sm:$0xf]
    %v139 = vld [vmem:[%s1 + $0x13c] sm:$0xf]
    %v140 = vld [vmem:[%s1 + $0x140] sm:$0xf]
    %v141 = vld [vmem:[%s1 + $0x144] sm:$0xf]
    %v142 = vld [vmem:[%s1 + $0x148] sm:$0xf]
    %v143 = vld [vmem:[%s1 + $0x14c] sm:$0xf]
    %v144 = vld [vmem:[%s1 + $0x150] sm:$0xf]
    %v145 = vld [vmem:[%s1 + $0x154] sm:$0xf]
    %v146 = vld [vmem:[%s1 + $0x158] sm:$0xf]
    %v147 = vld [vmem:[%s1 + $0x15c] sm:$0xf]
    %v148 = vld [vmem:[%s1 + $0x160] sm:$0xf]
    %v149 = vld [vmem:[%s1 + $0x164] sm:$0xf]
    %v150 = vld [vmem:[%s1 + $0x168] sm:$0xf]
    %v151 = vld [vmem:[%s1 + $0x16c] sm:$0xf]
    %v152 = vld [vmem:[%s1 + $0x170] sm:$0xf]
    %v153 = vld [vmem:[%s1 + $0x174] sm:$0xf]
    %v154 = vld [vmem:[%s1 + $0x178] sm:$0xf]
    %v155 = vld [vmem:[%s1 + $0x17c] sm:$0xf]
    %v156 = vld [vmem:[%s1 + $0x180] sm:$0xf]
    %v157 = vld [vmem:[%s1 + $0x184] sm:$0xf]
    %v158 = vld [vmem:[%s9] ss:$0 sm:$0xff]
    %v257 = vunpack.c.l.b16 %v60
    %v258 = vunpack.c.l.b16 %v61
    %v259 = vunpack.c.l.b16 %v62
    %v260 = vunpack.c.l.b16 %v63
    %v261 = vunpack.c.l.b16 %v64
    %v262 = vunpack.c.l.b16 %v65
    %v263 = vunpack.c.l.b16 %v66
    %v264 = vunpack.c.l.b16 %v67
    %v265 = vunpack.c.l.b16 %v68
    %v266 = vunpack.c.l.b16 %v69
    %v267 = vunpack.c.l.b16 %v70
    %v268 = vunpack.c.l.b16 %v71
    %v269 = vunpack.c.l.b16 %v72
    %v270 = vunpack.c.l.b16 %v73
    %v271 = vunpack.c.l.b16 %v74
    %v272 = vunpack.c.l.b16 %v75
    %v273 = vunpack.c.l.b16 %v76
    %v274 = vunpack.c.l.b16 %v77
    %v275 = vunpack.c.l.b16 %v78
    %v276 = vunpack.c.l.b16 %v79
    %v277 = vunpack.c.l.b16 %v80
    %v278 = vunpack.c.l.b16 %v81
    %v279 = vunpack.c.l.b16 %v82
    %v280 = vunpack.c.l.b16 %v83
    %v281 = vunpack.c.l.b16 %v84
    %v282 = vunpack.c.l.b16 %v85
    %v283 = vunpack.c.l.b16 %v86
    %v284 = vunpack.c.l.b16 %v87
    %v285 = vunpack.c.l.b16 %v88
    %v286 = vunpack.c.l.b16 %v89
    %v287 = vunpack.c.l.b16 %v90
    %v288 = vunpack.c.l.b16 %v91
    %v289 = vunpack.c.l.b16 %v92
    %v290 = vunpack.c.l.b16 %v93
    %v291 = vunpack.c.l.b16 %v94
    %v292 = vunpack.c.l.b16 %v95
    %v293 = vunpack.c.l.b16 %v96
    %v294 = vunpack.c.l.b16 %v97
    %v295 = vunpack.c.l.b16 %v98
    %v296 = vunpack.c.l.b16 %v99
    %v297 = vunpack.c.l.b16 %v100
    %v298 = vunpack.c.l.b16 %v101
    %v299 = vunpack.c.l.b16 %v102
    %v300 = vunpack.c.l.b16 %v103
    %v301 = vunpack.c.l.b16 %v104
    %v302 = vunpack.c.l.b16 %v105
    %v303 = vunpack.c.l.b16 %v106
    %v304 = vunpack.c.l.b16 %v107
    %v305 = vunpack.c.l.b16 %v108
    %v306 = vunpack.c.l.b16 %v109
    %v307 = vunpack.c.l.b16 %v110
    %v308 = vunpack.c.l.b16 %v111
    %v309 = vunpack.c.l.b16 %v112
    %v310 = vunpack.c.l.b16 %v113
    %v311 = vunpack.c.l.b16 %v114
    %v312 = vunpack.c.l.b16 %v115
    %v313 = vunpack.c.l.b16 %v116
    %v314 = vunpack.c.l.b16 %v117
    %v315 = vunpack.c.l.b16 %v118
    %v316 = vunpack.c.l.b16 %v119
    %v317 = vunpack.c.l.b16 %v120
    %v318 = vunpack.c.l.b16 %v121
    %v319 = vunpack.c.l.b16 %v122
    %v320 = vunpack.c.l.b16 %v123
    %v321 = vunpack.c.l.b16 %v124
    %v322 = vunpack.c.l.b16 %v125
    %v323 = vunpack.c.l.b16 %v126
    %v324 = vunpack.c.l.b16 %v127
    %v325 = vunpack.c.l.b16 %v128
    %v326 = vunpack.c.l.b16 %v129
    %v327 = vunpack.c.l.b16 %v130
    %v328 = vunpack.c.l.b16 %v131
    %v329 = vunpack.c.l.b16 %v132
    %v330 = vunpack.c.l.b16 %v133
    %v331 = vunpack.c.l.b16 %v134
    %v332 = vunpack.c.l.b16 %v135
    %v333 = vunpack.c.l.b16 %v136
    %v334 = vunpack.c.l.b16 %v137
    %v335 = vunpack.c.l.b16 %v138
    %v336 = vunpack.c.l.b16 %v139
    %v337 = vunpack.c.l.b16 %v140
    %v338 = vunpack.c.l.b16 %v141
    %v339 = vunpack.c.l.b16 %v142
    %v340 = vunpack.c.l.b16 %v143
    %v341 = vunpack.c.l.b16 %v144
    %v342 = vunpack.c.l.b16 %v145
    %v343 = vunpack.c.l.b16 %v146
    %v344 = vunpack.c.l.b16 %v147
    %v345 = vunpack.c.l.b16 %v148
    %v346 = vunpack.c.l.b16 %v149
    %v347 = vunpack.c.l.b16 %v150
    %v348 = vunpack.c.l.b16 %v151
    %v349 = vunpack.c.l.b16 %v152
    %v350 = vunpack.c.l.b16 %v153
    %v351 = vunpack.c.l.b16 %v154
    %v352 = vunpack.c.l.b16 %v155
    %v353 = vunpack.c.l.b16 %v156
    %v354 = vunpack.c.l.b16 %v157
    %v355 = vpack.c.b16 %v258, %v257
    %v356 = vpack.c.b16 %v260, %v259
    %v357 = vpack.c.b16 %v262, %v261
    %v358 = vpack.c.b16 %v264, %v263
    %v359 = vpack.c.b16 %v266, %v265
    %v360 = vpack.c.b16 %v268, %v267
    %v361 = vpack.c.b16 %v270, %v269
    %v362 = vpack.c.b16 %v272, %v271
    %v363 = vpack.c.b16 %v274, %v273
    %v364 = vpack.c.b16 %v276, %v275
    %v365 = vpack.c.b16 %v278, %v277
    %v366 = vpack.c.b16 %v280, %v279
    %v367 = vpack.c.b16 %v282, %v281
    %v368 = vpack.c.b16 %v284, %v283
    %v369 = vpack.c.b16 %v286, %v285
    %v370 = vpack.c.b16 %v288, %v287
    %v371 = vpack.c.b16 %v290, %v289
    %v372 = vpack.c.b16 %v292, %v291
    %v373 = vpack.c.b16 %v294, %v293
    %v374 = vpack.c.b16 %v296, %v295
    %v375 = vpack.c.b16 %v298, %v297
    %v376 = vpack.c.b16 %v300, %v299
    %v377 = vpack.c.b16 %v302, %v301
    %v378 = vpack.c.b16 %v304, %v303
    %v379 = vpack.c.b16 %v306, %v305
    %v380 = vpack.c.b16 %v308, %v307
    %v381 = vpack.c.b16 %v310, %v309
    %v382 = vpack.c.b16 %v312, %v311
    %v383 = vpack.c.b16 %v314, %v313
    %v384 = vpack.c.b16 %v316, %v315
    %v385 = vpack.c.b16 %v318, %v317
    %v386 = vpack.c.b16 %v320, %v319
    %v387 = vpack.c.b16 %v322, %v321
    %v388 = vpack.c.b16 %v324, %v323
    %v389 = vpack.c.b16 %v326, %v325
    %v390 = vpack.c.b16 %v328, %v327
    %v391 = vpack.c.b16 %v330, %v329
    %v392 = vpack.c.b16 %v332, %v331
    %v393 = vpack.c.b16 %v334, %v333
    %v394 = vpack.c.b16 %v336, %v335
    %v395 = vpack.c.b16 %v338, %v337
    %v396 = vpack.c.b16 %v340, %v339
    %v397 = vpack.c.b16 %v342, %v341
    %v398 = vpack.c.b16 %v344, %v343
    %v399 = vpack.c.b16 %v346, %v345
    %v400 = vpack.c.b16 %v348, %v347
    %v401 = vpack.c.b16 %v350, %v349
    %v402 = vpack.c.b16 %v352, %v351
    %v403 = vpack.c.b16 %v354, %v353
    %vm453 = vcmask 130048
    %v455 = vsel %vm453, %v59, 0
    %457 = vmatprep.subr.bf16.mxu0 0
    %458 = vmatpush1.bf16.msra.mxu0 %v362
    %459 = vmatprep.subr.bf16.mxu0 0
    %460 = vmatpush1.bf16.msra.mxu0 %v361
    %461 = vmatprep.subr.bf16.mxu0 0
    %462 = vmatpush1.bf16.msra.mxu0 %v360
    %463 = vmatprep.subr.bf16.mxu0 0
    %464 = vmatpush1.bf16.msra.mxu0 %v359
    %465 = vmatprep.subr.bf16.mxu0 0
    %466 = vmatpush1.bf16.msra.mxu0 %v358
    %467 = vmatprep.subr.bf16.mxu0 0
    %468 = vmatpush1.bf16.msra.mxu0 %v357
    %469 = vmatprep.subr.bf16.mxu0 0
    %470 = vmatpush1.bf16.msra.mxu0 %v356
    %471 = vmatprep.subr.bf16.mxu0 0
    %472 = vmatpush1.bf16.msra.mxu0 %v355
    %473 = vmatprep.subr.bf16.mxu0 0
    %474 = vmatpush2.bf16.msra.mxu0 %v370
    %475 = vmatprep.subr.bf16.mxu0 0
    %476 = vmatpush2.bf16.msra.mxu0 %v369
    %477 = vmatprep.subr.bf16.mxu0 0
    %478 = vmatpush2.bf16.msra.mxu0 %v368
    %479 = vmatprep.subr.bf16.mxu0 0
    %480 = vmatpush2.bf16.msra.mxu0 %v367
    %481 = vmatprep.subr.bf16.mxu0 0
    %482 = vmatpush2.bf16.msra.mxu0 %v366
    %483 = vmatprep.subr.bf16.mxu0 0
    %484 = vmatpush2.bf16.msra.mxu0 %v365
    %485 = vmatprep.subr.bf16.mxu0 0
    %486 = vmatpush2.bf16.msra.mxu0 %v364
    %487 = vmatprep.subr.bf16.mxu0 0
    %488 = vmatpush2.bf16.msra.mxu0 %v363
    %489 = vmatprep.mubr.bf16.mxu0 %v54
    %490 = vmatmul.mubr.bf16.gmra.mxu0 %v53
    %v491 = vpop.f32.mrf.mxu0
    %v492 = vadd.f32 %v158, %v491
    %v493 = vpop.f32.mrf.mxu0
    %v494 = vpop.f32.mrf.mxu0
    %v495 = vadd.f32 %v158, %v494
    %v496 = vpop.f32.mrf.mxu0
    %497 = vdwg.mxu0
    %498 = vmatprep.subr.bf16.mxu0 0
    %499 = vmatpush1.bf16.msra.mxu0 %v378
    %500 = vmatprep.subr.bf16.mxu0 0
    %501 = vmatpush1.bf16.msra.mxu0 %v377
    %502 = vmatprep.subr.bf16.mxu0 0
    %503 = vmatpush1.bf16.msra.mxu0 %v376
    %504 = vmatprep.subr.bf16.mxu0 0
    %505 = vmatpush1.bf16.msra.mxu0 %v375
    %506 = vmatprep.subr.bf16.mxu0 0
    %507 = vmatpush1.bf16.msra.mxu0 %v374
    %508 = vmatprep.subr.bf16.mxu0 0
    %509 = vmatpush1.bf16.msra.mxu0 %v373
    %510 = vmatprep.subr.bf16.mxu0 0
    %511 = vmatpush1.bf16.msra.mxu0 %v372
    %512 = vmatprep.subr.bf16.mxu0 0
    %513 = vmatpush1.bf16.msra.mxu0 %v371
    %514 = vmatprep.subr.bf16.mxu0 0
    %515 = vmatpush2.bf16.msra.mxu0 %v386
    %516 = vmatprep.subr.bf16.mxu0 0
    %517 = vmatpush2.bf16.msra.mxu0 %v385
    %518 = vmatprep.subr.bf16.mxu0 0
    %519 = vmatpush2.bf16.msra.mxu0 %v384
    %520 = vmatprep.subr.bf16.mxu0 0
    %521 = vmatpush2.bf16.msra.mxu0 %v383
    %522 = vmatprep.subr.bf16.mxu0 0
    %523 = vmatpush2.bf16.msra.mxu0 %v382
    %524 = vmatprep.subr.bf16.mxu0 0
    %525 = vmatpush2.bf16.msra.mxu0 %v381
    %526 = vmatprep.subr.bf16.mxu0 0
    %527 = vmatpush2.bf16.msra.mxu0 %v380
    %528 = vmatprep.subr.bf16.mxu0 0
    %529 = vmatpush2.bf16.msra.mxu0 %v379
    %530 = vmatprep.mubr.bf16.mxu0 %v56
    %531 = vmatmul.mubr.bf16.gmra.mxu0 %v55
    %v532 = vpop.f32.mrf.mxu0
    %v533 = vadd.f32 %v492, %v532
    %v534 = vpop.f32.mrf.mxu0
    %v535 = vpop.f32.mrf.mxu0
    %v536 = vadd.f32 %v495, %v535
    %v537 = vpop.f32.mrf.mxu0
    %538 = vdwg.mxu0
    %539 = vmatprep.subr.bf16.mxu0 0
    %540 = vmatpush1.bf16.msra.mxu0 %v394
    %541 = vmatprep.subr.bf16.mxu0 0
    %542 = vmatpush1.bf16.msra.mxu0 %v393
    %543 = vmatprep.subr.bf16.mxu0 0
    %544 = vmatpush1.bf16.msra.mxu0 %v392
    %545 = vmatprep.subr.bf16.mxu0 0
    %546 = vmatpush1.bf16.msra.mxu0 %v391
    %547 = vmatprep.subr.bf16.mxu0 0
    %548 = vmatpush1.bf16.msra.mxu0 %v390
    %549 = vmatprep.subr.bf16.mxu0 0
    %550 = vmatpush1.bf16.msra.mxu0 %v389
    %551 = vmatprep.subr.bf16.mxu0 0
    %552 = vmatpush1.bf16.msra.mxu0 %v388
    %553 = vmatprep.subr.bf16.mxu0 0
    %554 = vmatpush1.bf16.msra.mxu0 %v387
    %555 = vmatprep.subr.bf16.mxu0 0
    %556 = vmatpush2.bf16.msra.mxu0 %v402
    %557 = vmatprep.subr.bf16.mxu0 0
    %558 = vmatpush2.bf16.msra.mxu0 %v401
    %559 = vmatprep.subr.bf16.mxu0 0
    %560 = vmatpush2.bf16.msra.mxu0 %v400
    %561 = vmatprep.subr.bf16.mxu0 0
    %562 = vmatpush2.bf16.msra.mxu0 %v399
    %563 = vmatprep.subr.bf16.mxu0 0
    %564 = vmatpush2.bf16.msra.mxu0 %v398
    %565 = vmatprep.subr.bf16.mxu0 0
    %566 = vmatpush2.bf16.msra.mxu0 %v397
    %567 = vmatprep.subr.bf16.mxu0 0
    %568 = vmatpush2.bf16.msra.mxu0 %v396
    %569 = vmatprep.subr.bf16.mxu0 0
    %570 = vmatpush2.bf16.msra.mxu0 %v395
    %571 = vmatprep.mubr.bf16.mxu0 %v58
    %572 = vmatmul.mubr.bf16.gmra.mxu0 %v57
    %v573 = vpop.f32.mrf.mxu0
    %v574 = vadd.f32 %v533, %v573
    %v575 = vpop.f32.mrf.mxu0
    %v576 = vpop.f32.mrf.mxu0
    %v577 = vadd.f32 %v536, %v576
    %v578 = vpop.f32.mrf.mxu0
    %579 = vdwg.mxu0
    %580 = vmatprep.subr.bf16.mxu0 0
    %581 = vmatpush1.bf16.msra.mxu0 0
    %582 = vmatprep.subr.bf16.mxu0 0
    %583 = vmatpush1.bf16.msra.mxu0 0
    %584 = vmatprep.subr.bf16.mxu0 0
    %585 = vmatpush1.bf16.msra.mxu0 0
    %586 = vmatprep.subr.bf16.mxu0 0
    %587 = vmatpush1.bf16.msra.mxu0 0
    %588 = vmatprep.subr.bf16.mxu0 0
    %589 = vmatpush1.bf16.msra.mxu0 0
    %590 = vmatprep.subr.bf16.mxu0 0
    %591 = vmatpush1.bf16.msra.mxu0 0
    %592 = vmatprep.subr.bf16.mxu0 0
    %593 = vmatpush1.bf16.msra.mxu0 0
    %594 = vmatprep.subr.bf16.mxu0 0
    %595 = vmatpush1.bf16.msra.mxu0 %v403
    %596 = vmatprep.subr.bf16.mxu0 0
    %597 = vmatpush2.bf16.msra.mxu0 0
    %598 = vmatprep.subr.bf16.mxu0 0
    %599 = vmatpush2.bf16.msra.mxu0 0
    %600 = vmatprep.subr.bf16.mxu0 0
    %601 = vmatpush2.bf16.msra.mxu0 0
    %602 = vmatprep.subr.bf16.mxu0 0
    %603 = vmatpush2.bf16.msra.mxu0 0
    %604 = vmatprep.subr.bf16.mxu0 0
    %605 = vmatpush2.bf16.msra.mxu0 0
    %606 = vmatprep.subr.bf16.mxu0 0
    %607 = vmatpush2.bf16.msra.mxu0 0
    %608 = vmatprep.subr.bf16.mxu0 0
    %609 = vmatpush2.bf16.msra.mxu0 0
    %610 = vmatprep.subr.bf16.mxu0 0
    %611 = vmatpush2.bf16.msra.mxu0 0
    %612 = vmatprep.mubr.bf16.mxu0 0
    %613 = vmatmul.mubr.bf16.gmra.mxu0 %v455
    %v614 = vpop.f32.mrf.mxu0
    %v615 = vadd.f32 %v574, %v614
    %v616 = vpop.f32.mrf.mxu0
    %v617 = vpop.f32.mrf.mxu0
    %v618 = vadd.f32 %v577, %v617
    %v619 = vpop.f32.mrf.mxu0
    %620 = vdwg.mxu0
    %v621 = vmax.f32 %v615, 0.0
    %v622 = vmax.f32 %v618, 0.0
    %v623 = vpack.c.bf16 %v622, %v621
    %v624 = vld [vmem:[%s2] sm:$0xf]
    %v625 = vld [vmem:[%s2 + $0x4] sm:$0xf]
    %v626 = vld [vmem:[%s2 + $0x8] sm:$0xf]
    %v627 = vld [vmem:[%s2 + $0xc] sm:$0xf]
    %v628 = vld [vmem:[%s2 + $0x10] sm:$0xf]
    %v629 = vld [vmem:[%s2 + $0x14] sm:$0xf]
    %v630 = vld [vmem:[%s2 + $0x18] sm:$0xf]
    %v631 = vld [vmem:[%s2 + $0x1c] sm:$0xf]
    %v632 = vld [vmem:[%s2 + $0x20] sm:$0xf]
    %v633 = vld [vmem:[%s2 + $0x24] sm:$0xf]
    %v634 = vld [vmem:[%s2 + $0x28] sm:$0xf]
    %v635 = vld [vmem:[%s2 + $0x2c] sm:$0xf]
    %v636 = vld [vmem:[%s2 + $0x30] sm:$0xf]
    %v637 = vld [vmem:[%s2 + $0x34] sm:$0xf]
    %v638 = vld [vmem:[%s2 + $0x38] sm:$0xf]
    %v639 = vld [vmem:[%s2 + $0x3c] sm:$0xf]
    %v640 = vld [vmem:[%s9 + $0x1] ss:$0 sm:$0xff]
    %v657 = vunpack.c.l.b16 %v624
    %v658 = vunpack.c.l.b16 %v625
    %v659 = vunpack.c.l.b16 %v626
    %v660 = vunpack.c.l.b16 %v627
    %v661 = vunpack.c.l.b16 %v628
    %v662 = vunpack.c.l.b16 %v629
    %v663 = vunpack.c.l.b16 %v630
    %v664 = vunpack.c.l.b16 %v631
    %v665 = vunpack.c.l.b16 %v632
    %v666 = vunpack.c.l.b16 %v633
    %v667 = vunpack.c.l.b16 %v634
    %v668 = vunpack.c.l.b16 %v635
    %v669 = vunpack.c.l.b16 %v636
    %v670 = vunpack.c.l.b16 %v637
    %v671 = vunpack.c.l.b16 %v638
    %v672 = vunpack.c.l.b16 %v639
    %v673 = vpack.c.b16 %v658, %v657
    %v674 = vpack.c.b16 %v660, %v659
    %v675 = vpack.c.b16 %v662, %v661
    %v676 = vpack.c.b16 %v664, %v663
    %v677 = vpack.c.b16 %v666, %v665
    %v678 = vpack.c.b16 %v668, %v667
    %v679 = vpack.c.b16 %v670, %v669
    %v680 = vpack.c.b16 %v672, %v671
    %689 = vmatprep.subr.bf16.mxu0 0
    %690 = vmatpush1.bf16.msra.mxu0 %v680
    %691 = vmatprep.subr.bf16.mxu0 0
    %692 = vmatpush1.bf16.msra.mxu0 %v679
    %693 = vmatprep.subr.bf16.mxu0 0
    %694 = vmatpush1.bf16.msra.mxu0 %v678
    %695 = vmatprep.subr.bf16.mxu0 0
    %696 = vmatpush1.bf16.msra.mxu0 %v677
    %697 = vmatprep.subr.bf16.mxu0 0
    %698 = vmatpush1.bf16.msra.mxu0 %v676
    %699 = vmatprep.subr.bf16.mxu0 0
    %700 = vmatpush1.bf16.msra.mxu0 %v675
    %701 = vmatprep.subr.bf16.mxu0 0
    %702 = vmatpush1.bf16.msra.mxu0 %v674
    %703 = vmatprep.subr.bf16.mxu0 0
    %704 = vmatpush1.bf16.msra.mxu0 %v673
    %705 = vmatprep.subr.bf16.mxu0 0
    %706 = vmatpush2.bf16.msra.mxu0 0
    %707 = vmatprep.subr.bf16.mxu0 0
    %708 = vmatpush2.bf16.msra.mxu0 0
    %709 = vmatprep.subr.bf16.mxu0 0
    %710 = vmatpush2.bf16.msra.mxu0 0
    %711 = vmatprep.subr.bf16.mxu0 0
    %712 = vmatpush2.bf16.msra.mxu0 0
    %713 = vmatprep.subr.bf16.mxu0 0
    %714 = vmatpush2.bf16.msra.mxu0 0
    %715 = vmatprep.subr.bf16.mxu0 0
    %716 = vmatpush2.bf16.msra.mxu0 0
    %717 = vmatprep.subr.bf16.mxu0 0
    %718 = vmatpush2.bf16.msra.mxu0 0
    %719 = vmatprep.subr.bf16.mxu0 0
    %720 = vmatpush2.bf16.msra.mxu0 0
    %721 = vmatprep.mubr.bf16.mxu0 0
    %722 = vmatmul.mubr.bf16.gmra.mxu0 %v623
    %v723 = vpop.f32.mrf.mxu0
    %v724 = vadd.f32 %v640, %v723
    %v725 = vpop.f32.mrf.mxu0
    %v726 = vpop.f32.mrf.mxu0
    %v727 = vadd.f32 %v640, %v726
    %v728 = vpop.f32.mrf.mxu0
    %729 = vdwg.mxu0
    %v730 = vmax.f32 %v724, 0.0
    %v731 = vmax.f32 %v727, 0.0
    %v732 = vpack.c.bf16 %v731, %v730
    %v733 = vld [vmem:[%s3] sm:$0xf]
    %v734 = vld [vmem:[%s3 + $0x4] sm:$0xf]
    %v735 = vld [vmem:[%s3 + $0x8] sm:$0xf]
    %v736 = vld [vmem:[%s3 + $0xc] sm:$0xf]
    %v737 = vld [vmem:[%s3 + $0x10] sm:$0xf]
    %v738 = vld [vmem:[%s3 + $0x14] sm:$0xf]
    %v739 = vld [vmem:[%s3 + $0x18] sm:$0xf]
    %v740 = vld [vmem:[%s3 + $0x1c] sm:$0xf]
    %v741 = vld [vmem:[%s9 + $0x2] ss:$0 sm:$0xff]
    %v750 = vunpack.c.l.b16 %v733
    %v751 = vunpack.c.l.b16 %v734
    %v752 = vunpack.c.l.b16 %v735
    %v753 = vunpack.c.l.b16 %v736
    %v754 = vunpack.c.l.b16 %v737
    %v755 = vunpack.c.l.b16 %v738
    %v756 = vunpack.c.l.b16 %v739
    %v757 = vunpack.c.l.b16 %v740
    %v758 = vpack.c.b16 %v751, %v750
    %v759 = vpack.c.b16 %v753, %v752
    %v760 = vpack.c.b16 %v755, %v754
    %v761 = vpack.c.b16 %v757, %v756
    %vm766 = vcmask 523264
    %v768 = vsel %vm766, %v732, 0
    %770 = vmatprep.subr.bf16.mxu0 0
    %771 = vmatpush1.bf16.msra.mxu0 0
    %772 = vmatprep.subr.bf16.mxu0 0
    %773 = vmatpush1.bf16.msra.mxu0 0
    %774 = vmatprep.subr.bf16.mxu0 0
    %775 = vmatpush1.bf16.msra.mxu0 0
    %776 = vmatprep.subr.bf16.mxu0 0
    %777 = vmatpush1.bf16.msra.mxu0 0
    %778 = vmatprep.subr.bf16.mxu0 0
    %779 = vmatpush1.bf16.msra.mxu0 %v761
    %780 = vmatprep.subr.bf16.mxu0 0
    %781 = vmatpush1.bf16.msra.mxu0 %v760
    %782 = vmatprep.subr.bf16.mxu0 0
    %783 = vmatpush1.bf16.msra.mxu0 %v759
    %784 = vmatprep.subr.bf16.mxu0 0
    %785 = vmatpush1.bf16.msra.mxu0 %v758
    %786 = vmatprep.subr.bf16.mxu0 0
    %787 = vmatpush2.bf16.msra.mxu0 0
    %788 = vmatprep.subr.bf16.mxu0 0
    %789 = vmatpush2.bf16.msra.mxu0 0
    %790 = vmatprep.subr.bf16.mxu0 0
    %791 = vmatpush2.bf16.msra.mxu0 0
    %792 = vmatprep.subr.bf16.mxu0 0
    %793 = vmatpush2.bf16.msra.mxu0 0
    %794 = vmatprep.subr.bf16.mxu0 0
    %795 = vmatpush2.bf16.msra.mxu0 0
    %796 = vmatprep.subr.bf16.mxu0 0
    %797 = vmatpush2.bf16.msra.mxu0 0
    %798 = vmatprep.subr.bf16.mxu0 0
    %799 = vmatpush2.bf16.msra.mxu0 0
    %800 = vmatprep.subr.bf16.mxu0 0
    %801 = vmatpush2.bf16.msra.mxu0 0
    %802 = vmatprep.mubr.bf16.mxu0 0
    %803 = vmatmul.mubr.bf16.gmra.mxu0 %v768
    %v804 = vpop.f32.mrf.mxu0
    %v805 = vadd.f32 %v741, %v804
    %v806 = vpop.f32.mrf.mxu0
    %v807 = vpop.f32.mrf.mxu0
    %v808 = vadd.f32 %v741, %v807
    %v809 = vpop.f32.mrf.mxu0
    %810 = vdwg.mxu0
    %v811 = vmax.f32 %v805, 0.0
    %v812 = vmax.f32 %v808, 0.0
    %v813 = vpack.c.bf16 %v812, %v811
    %v814 = vld [vmem:[%s4] sm:$0xf]
    %v815 = vld [vmem:[%s4 + $0x4] sm:$0x3]
    %v816 = vld [vmem:[%s9 + $0x3] ss:$0 sm:$0xff]
    %v819 = vunpack.c.l.b16 %v814
    %v820 = vunpack.c.l.b16 %v815
    %v821 = vpack.c.b16 %v820, %v819
    %vm822 = vcmask 97280
    %v824 = vsel %vm822, %v813, 0
    %vm826 = vcmask 1045504
    %v828 = vsel %vm826, %v821, 0
    %830 = vmatprep.subr.bf16.mxu0 0
    %831 = vmatpush1.bf16.msra.mxu0 0
    %832 = vmatprep.subr.bf16.mxu0 0
    %833 = vmatpush1.bf16.msra.mxu0 0
    %834 = vmatprep.subr.bf16.mxu0 0
    %835 = vmatpush1.bf16.msra.mxu0 0
    %836 = vmatprep.subr.bf16.mxu0 0
    %837 = vmatpush1.bf16.msra.mxu0 0
    %838 = vmatprep.subr.bf16.mxu0 0
    %839 = vmatpush1.bf16.msra.mxu0 0
    %840 = vmatprep.subr.bf16.mxu0 0
    %841 = vmatpush1.bf16.msra.mxu0 0
    %842 = vmatprep.subr.bf16.mxu0 0
    %843 = vmatpush1.bf16.msra.mxu0 0
    %844 = vmatprep.subr.bf16.mxu0 0
    %845 = vmatpush1.bf16.msra.mxu0 %v828
    %846 = vmatprep.subr.bf16.mxu0 0
    %847 = vmatpush2.bf16.msra.mxu0 0
    %848 = vmatprep.subr.bf16.mxu0 0
    %849 = vmatpush2.bf16.msra.mxu0 0
    %850 = vmatprep.subr.bf16.mxu0 0
    %851 = vmatpush2.bf16.msra.mxu0 0
    %852 = vmatprep.subr.bf16.mxu0 0
    %853 = vmatpush2.bf16.msra.mxu0 0
    %854 = vmatprep.subr.bf16.mxu0 0
    %855 = vmatpush2.bf16.msra.mxu0 0
    %856 = vmatprep.subr.bf16.mxu0 0
    %857 = vmatpush2.bf16.msra.mxu0 0
    %858 = vmatprep.subr.bf16.mxu0 0
    %859 = vmatpush2.bf16.msra.mxu0 0
    %860 = vmatprep.subr.bf16.mxu0 0
    %861 = vmatpush2.bf16.msra.mxu0 0
    %862 = vmatprep.mubr.bf16.mxu0 0
    %863 = vmatmul.mubr.bf16.gmra.mxu0 %v824
    %v864 = vpop.f32.mrf.mxu0
    %v865 = vadd.f32 %v816, %v864
    %v866 = vpop.f32.mrf.mxu0
    %v867 = vpop.f32.mrf.mxu0
    %v868 = vadd.f32 %v816, %v867
    %v869 = vpop.f32.mrf.mxu0
    %870 = vdwg.mxu0
    %vm871 = vcmask 23552
    %872 = vst.msk [vmem:[%s10] sm:$0xff] %vm871, %v865
    %873 = vst.msk [vmem:[%s10 + $0x8] sm:$0xff] %vm871, %v868
    %v874 = vpack.c.bf16 %v868, %v865
    %v875 = vld [vmem:[%s5] sm:$0x3]
    %v876 = vld [vmem:[%s9 + $0x4] ss:$0 sm:$0xff]
    %v878 = vsel %vm871, %v874, 0
    %vm880 = vcmask 1040384
    %vm881 = vcmask 1041408
    %v882 = vsel %vm880, 4294967295, 65535
    %v883 = vsel %vm881, %v882, 0
    %v885 = vand.u32 %v875, %v883
    %887 = vmatprep.subr.bf16.mxu0 0
    %888 = vmatpush1.bf16.msra.mxu0 0
    %889 = vmatprep.subr.bf16.mxu0 0
    %890 = vmatpush1.bf16.msra.mxu0 0
    %891 = vmatprep.subr.bf16.mxu0 0
    %892 = vmatpush1.bf16.msra.mxu0 0
    %893 = vmatprep.subr.bf16.mxu0 0
    %894 = vmatpush1.bf16.msra.mxu0 0
    %895 = vmatprep.subr.bf16.mxu0 0
    %896 = vmatpush1.bf16.msra.mxu0 0
    %897 = vmatprep.subr.bf16.mxu0 0
    %898 = vmatpush1.bf16.msra.mxu0 0
    %899 = vmatprep.subr.bf16.mxu0 0
    %900 = vmatpush1.bf16.msra.mxu0 0
    %901 = vmatprep.subr.bf16.mxu0 0
    %902 = vmatpush1.bf16.msra.mxu0 %v885
    %903 = vmatprep.subr.bf16.mxu0 0
    %904 = vmatpush2.bf16.msra.mxu0 0
    %905 = vmatprep.subr.bf16.mxu0 0
    %906 = vmatpush2.bf16.msra.mxu0 0
    %907 = vmatprep.subr.bf16.mxu0 0
    %908 = vmatpush2.bf16.msra.mxu0 0
    %909 = vmatprep.subr.bf16.mxu0 0
    %910 = vmatpush2.bf16.msra.mxu0 0
    %911 = vmatprep.subr.bf16.mxu0 0
    %912 = vmatpush2.bf16.msra.mxu0 0
    %913 = vmatprep.subr.bf16.mxu0 0
    %914 = vmatpush2.bf16.msra.mxu0 0
    %915 = vmatprep.subr.bf16.mxu0 0
    %916 = vmatpush2.bf16.msra.mxu0 0
    %917 = vmatprep.subr.bf16.mxu0 0
    %918 = vmatpush2.bf16.msra.mxu0 0
    %919 = vmatprep.mubr.bf16.mxu0 0
    %920 = vmatmul.mubr.bf16.gmra.mxu0 %v878
    %v921 = vpop.f32.mrf.mxu0
    %v922 = vadd.f32 %v876, %v921
    %v923 = vpop.f32.mrf.mxu0
    %v924 = vpop.f32.mrf.mxu0
    %v925 = vadd.f32 %v876, %v924
    %v926 = vpop.f32.mrf.mxu0
    %927 = vdwg.mxu0
    %v928 = vmax.f32 %v922, 0.0
    %v929 = vmax.f32 %v925, 0.0
    %v930 = vpack.c.bf16 %v929, %v928
    %v931 = vld [vmem:[%s6] sm:$0xf]
    %v932 = vld [vmem:[%s6 + $0x4] sm:$0x3]
    %v933 = vld [vmem:[%s9 + $0x5] ss:$0 sm:$0xff]
    %v936 = vunpack.c.l.b16 %v931
    %v937 = vunpack.c.l.b16 %v932
    %v938 = vpack.c.b16 %v937, %v936
    %v940 = vsel %vm822, %v930, 0
    %v943 = vsel %vm826, %v938, 0
    %945 = vmatprep.subr.bf16.mxu0 0
    %946 = vmatpush1.bf16.msra.mxu0 0
    %947 = vmatprep.subr.bf16.mxu0 0
    %948 = vmatpush1.bf16.msra.mxu0 0
    %949 = vmatprep.subr.bf16.mxu0 0
    %950 = vmatpush1.bf16.msra.mxu0 0
    %951 = vmatprep.subr.bf16.mxu0 0
    %952 = vmatpush1.bf16.msra.mxu0 0
    %953 = vmatprep.subr.bf16.mxu0 0
    %954 = vmatpush1.bf16.msra.mxu0 0
    %955 = vmatprep.subr.bf16.mxu0 0
    %956 = vmatpush1.bf16.msra.mxu0 0
    %957 = vmatprep.subr.bf16.mxu0 0
    %958 = vmatpush1.bf16.msra.mxu0 0
    %959 = vmatprep.subr.bf16.mxu0 0
    %960 = vmatpush1.bf16.msra.mxu0 %v943
    %961 = vmatprep.subr.bf16.mxu0 0
    %962 = vmatpush2.bf16.msra.mxu0 0
    %963 = vmatprep.subr.bf16.mxu0 0
    %964 = vmatpush2.bf16.msra.mxu0 0
    %965 = vmatprep.subr.bf16.mxu0 0
    %966 = vmatpush2.bf16.msra.mxu0 0
    %967 = vmatprep.subr.bf16.mxu0 0
    %968 = vmatpush2.bf16.msra.mxu0 0
    %969 = vmatprep.subr.bf16.mxu0 0
    %970 = vmatpush2.bf16.msra.mxu0 0
    %971 = vmatprep.subr.bf16.mxu0 0
    %972 = vmatpush2.bf16.msra.mxu0 0
    %973 = vmatprep.subr.bf16.mxu0 0
    %974 = vmatpush2.bf16.msra.mxu0 0
    %975 = vmatprep.subr.bf16.mxu0 0
    %976 = vmatpush2.bf16.msra.mxu0 0
    %977 = vmatprep.mubr.bf16.mxu0 0
    %978 = vmatmul.mubr.bf16.gmra.mxu0 %v940
    %v979 = vpop.f32.mrf.mxu0
    %v980 = vadd.f32 %v933, %v979
    %v981 = vpop.f32.mrf.mxu0
    %v982 = vpop.f32.mrf.mxu0
    %v983 = vadd.f32 %v933, %v982
    %v984 = vpop.f32.mrf.mxu0
    %985 = vdwg.mxu0
    %v986 = vmax.f32 %v980, 0.0
    %v987 = vmax.f32 %v983, 0.0
    %v988 = vpack.c.bf16 %v987, %v986
    %v989 = vld [vmem:[%s7] sm:$0xf]
    %v990 = vld [vmem:[%s7 + $0x4] sm:$0xf]
    %v991 = vld [vmem:[%s7 + $0x8] sm:$0xf]
    %v992 = vld [vmem:[%s7 + $0xc] sm:$0xf]
    %v993 = vld [vmem:[%s7 + $0x10] sm:$0xf]
    %v994 = vld [vmem:[%s7 + $0x14] sm:$0xf]
    %v995 = vld [vmem:[%s7 + $0x18] sm:$0xf]
    %v996 = vld [vmem:[%s7 + $0x1c] sm:$0xf]
    %v997 = vld [vmem:[%s9 + $0x6] ss:$0 sm:$0xff]
    %v1006 = vunpack.c.l.b16 %v989
    %v1007 = vunpack.c.l.b16 %v990
    %v1008 = vunpack.c.l.b16 %v991
    %v1009 = vunpack.c.l.b16 %v992
    %v1010 = vunpack.c.l.b16 %v993
    %v1011 = vunpack.c.l.b16 %v994
    %v1012 = vunpack.c.l.b16 %v995
    %v1013 = vunpack.c.l.b16 %v996
    %v1014 = vpack.c.b16 %v1007, %v1006
    %v1015 = vpack.c.b16 %v1009, %v1008
    %v1016 = vpack.c.b16 %v1011, %v1010
    %v1017 = vpack.c.b16 %v1013, %v1012
    %v1023 = vsel %vm766, %v988, 0
    %1025 = vmatprep.subr.bf16.mxu0 0
    %1026 = vmatpush1.bf16.msra.mxu0 0
    %1027 = vmatprep.subr.bf16.mxu0 0
    %1028 = vmatpush1.bf16.msra.mxu0 0
    %1029 = vmatprep.subr.bf16.mxu0 0
    %1030 = vmatpush1.bf16.msra.mxu0 0
    %1031 = vmatprep.subr.bf16.mxu0 0
    %1032 = vmatpush1.bf16.msra.mxu0 0
    %1033 = vmatprep.subr.bf16.mxu0 0
    %1034 = vmatpush1.bf16.msra.mxu0 %v1017
    %1035 = vmatprep.subr.bf16.mxu0 0
    %1036 = vmatpush1.bf16.msra.mxu0 %v1016
    %1037 = vmatprep.subr.bf16.mxu0 0
    %1038 = vmatpush1.bf16.msra.mxu0 %v1015
    %1039 = vmatprep.subr.bf16.mxu0 0
    %1040 = vmatpush1.bf16.msra.mxu0 %v1014
    %1041 = vmatprep.subr.bf16.mxu0 0
    %1042 = vmatpush2.bf16.msra.mxu0 0
    %1043 = vmatprep.subr.bf16.mxu0 0
    %1044 = vmatpush2.bf16.msra.mxu0 0
    %1045 = vmatprep.subr.bf16.mxu0 0
    %1046 = vmatpush2.bf16.msra.mxu0 0
    %1047 = vmatprep.subr.bf16.mxu0 0
    %1048 = vmatpush2.bf16.msra.mxu0 0
    %1049 = vmatprep.subr.bf16.mxu0 0
    %1050 = vmatpush2.bf16.msra.mxu0 0
    %1051 = vmatprep.subr.bf16.mxu0 0
    %1052 = vmatpush2.bf16.msra.mxu0 0
    %1053 = vmatprep.subr.bf16.mxu0 0
    %1054 = vmatpush2.bf16.msra.mxu0 0
    %1055 = vmatprep.subr.bf16.mxu0 0
    %1056 = vmatpush2.bf16.msra.mxu0 0
    %1057 = vmatprep.mubr.bf16.mxu0 0
    %1058 = vmatmul.mubr.bf16.gmra.mxu0 %v1023
    %v1059 = vpop.f32.mrf.mxu0
    %v1060 = vadd.f32 %v997, %v1059
    %v1061 = vpop.f32.mrf.mxu0
    %v1062 = vpop.f32.mrf.mxu0
    %v1063 = vadd.f32 %v997, %v1062
    %v1064 = vpop.f32.mrf.mxu0
    %1065 = vdwg.mxu0
    %v1066 = vmax.f32 %v1060, 0.0
    %v1067 = vmax.f32 %v1063, 0.0
    %v1068 = vpack.c.bf16 %v1067, %v1066
    %v1069 = vld [vmem:[%s8] sm:$0xff]
    %v1070 = vld [vmem:[%s8 + $0x8] sm:$0xff]
    %v1071 = vld [vmem:[%s8 + $0x10] sm:$0xff]
    %v1072 = vld [vmem:[%s8 + $0x18] sm:$0xf]
    %v1073 = vld [vmem:[%s8 + $0x1c] sm:$0xff]
    %v1074 = vld [vmem:[%s8 + $0x24] sm:$0xff]
    %v1075 = vld [vmem:[%s8 + $0x2c] sm:$0xff]
    %v1076 = vld [vmem:[%s8 + $0x34] sm:$0xf]
    %v1077 = vld [vmem:[%s8 + $0x38] sm:$0xff]
    %v1078 = vld [vmem:[%s8 + $0x40] sm:$0xff]
    %v1079 = vld [vmem:[%s8 + $0x48] sm:$0xff]
    %v1080 = vld [vmem:[%s8 + $0x50] sm:$0xf]
    %v1081 = vld [vmem:[%s8 + $0x54] sm:$0xff]
    %v1082 = vld [vmem:[%s8 + $0x5c] sm:$0xff]
    %v1083 = vld [vmem:[%s8 + $0x64] sm:$0xff]
    %v1084 = vld [vmem:[%s8 + $0x6c] sm:$0xf]
    %v1085 = vld [vmem:[%s8 + $0x70] sm:$0xff]
    %v1086 = vld [vmem:[%s8 + $0x78] sm:$0xff]
    %v1087 = vld [vmem:[%s8 + $0x80] sm:$0xff]
    %v1088 = vld [vmem:[%s8 + $0x88] sm:$0xf]
    %v1089 = vld [vmem:[%s8 + $0x8c] sm:$0xff]
    %v1090 = vld [vmem:[%s8 + $0x94] sm:$0xff]
    %v1091 = vld [vmem:[%s8 + $0x9c] sm:$0xff]
    %v1092 = vld [vmem:[%s8 + $0xa4] sm:$0xf]
    %v1093 = vld [vmem:[%s8 + $0xa8] sm:$0xff]
    %v1094 = vld [vmem:[%s8 + $0xb0] sm:$0xff]
    %v1095 = vld [vmem:[%s8 + $0xb8] sm:$0xff]
    %v1096 = vld [vmem:[%s8 + $0xc0] sm:$0xf]
    %v1097 = vld [vmem:[%s8 + $0xc4] sm:$0xff]
    %v1098 = vld [vmem:[%s8 + $0xcc] sm:$0xff]
    %v1099 = vld [vmem:[%s8 + $0xd4] sm:$0xff]
    %v1100 = vld [vmem:[%s8 + $0xdc] sm:$0xf]
    %v1101 = vld [vmem:[%s8 + $0xe0] sm:$0xff]
    %v1102 = vld [vmem:[%s8 + $0xe8] sm:$0xff]
    %v1103 = vld [vmem:[%s8 + $0xf0] sm:$0xff]
    %v1104 = vld [vmem:[%s8 + $0xf8] sm:$0xf]
    %v1105 = vld [vmem:[%s8 + $0xfc] sm:$0xff]
    %v1106 = vld [vmem:[%s8 + $0x104] sm:$0xff]
    %v1107 = vld [vmem:[%s8 + $0x10c] sm:$0xff]
    %v1108 = vld [vmem:[%s8 + $0x114] sm:$0xf]
    %v1109 = vld [vmem:[%s8 + $0x118] sm:$0xff]
    %v1110 = vld [vmem:[%s8 + $0x120] sm:$0xff]
    %v1111 = vld [vmem:[%s8 + $0x128] sm:$0xff]
    %v1112 = vld [vmem:[%s8 + $0x130] sm:$0xf]
    %v1113 = vld [vmem:[%s8 + $0x134] sm:$0xff]
    %v1114 = vld [vmem:[%s8 + $0x13c] sm:$0xff]
    %v1115 = vld [vmem:[%s8 + $0x144] sm:$0xff]
    %v1116 = vld [vmem:[%s8 + $0x14c] sm:$0xf]
    %v1117 = vld [vmem:[%s8 + $0x150] sm:$0xff]
    %v1118 = vld [vmem:[%s8 + $0x158] sm:$0xff]
    %v1119 = vld [vmem:[%s8 + $0x160] sm:$0xff]
    %v1120 = vld [vmem:[%s8 + $0x168] sm:$0xf]
    %v1121 = vld [vmem:[%s8 + $0x16c] sm:$0xff]
    %v1122 = vld [vmem:[%s8 + $0x174] sm:$0xff]
    %v1123 = vld [vmem:[%s8 + $0x17c] sm:$0xff]
    %v1124 = vld [vmem:[%s8 + $0x184] sm:$0xf]
    %v1125 = vld [vmem:[%s8 + $0x188] sm:$0xff]
    %v1126 = vld [vmem:[%s8 + $0x190] sm:$0xff]
    %v1127 = vld [vmem:[%s8 + $0x198] sm:$0xff]
    %v1128 = vld [vmem:[%s8 + $0x1a0] sm:$0xf]
    %v1129 = vld [vmem:[%s8 + $0x1a4] sm:$0xff]
    %v1130 = vld [vmem:[%s8 + $0x1ac] sm:$0xff]
    %v1131 = vld [vmem:[%s8 + $0x1b4] sm:$0xff]
    %v1132 = vld [vmem:[%s8 + $0x1bc] sm:$0xf]
    %s1133 = scalar_lea.vmem %s9, 7
    %v1134 = vld [vmem:[%s1133] ss:$8 sm:$0xf]
    %v1135 = vld [vmem:[%s1133] ss:$8 sm:$0x70]
    %v1136 = vor.u32 %v1134, %v1135
    %v1138 = vlaneseq
    %v1139 = vshrl.u32 %v1138, 7
    %v1140 = vsub.s32 0, %v1139
    %v1141 = vrot.slane %v1136, %v1140
    %v1142 = vlaneseq
    %v1143 = vshrl.u32 %v1142, 7
    %v1144 = vsub.s32 1, %v1143
    %v1145 = vrot.slane %v1136, %v1144
    %v1146 = vlaneseq
    %v1147 = vshrl.u32 %v1146, 7
    %v1148 = vsub.s32 2, %v1147
    %v1149 = vrot.slane %v1136, %v1148
    %v1150 = vlaneseq
    %v1151 = vshrl.u32 %v1150, 7
    %v1152 = vsub.s32 3, %v1151
    %v1153 = vrot.slane %v1136, %v1152
    %v1154 = vlaneseq
    %v1155 = vshrl.u32 %v1154, 7
    %v1156 = vsub.s32 4, %v1155
    %v1157 = vrot.slane %v1136, %v1156
    %v1158 = vlaneseq
    %v1159 = vshrl.u32 %v1158, 7
    %v1160 = vsub.s32 5, %v1159
    %v1161 = vrot.slane %v1136, %v1160
    %v1162 = vlaneseq
    %v1163 = vshrl.u32 %v1162, 7
    %v1164 = vsub.s32 6, %v1163
    %v1165 = vrot.slane %v1136, %v1164
    %v1237 = vunpack.c.l.b16 %v1069
    %v1238 = vunpack.c.h.b16 %v1069
    %v1239 = vunpack.c.l.b16 %v1070
    %v1240 = vunpack.c.h.b16 %v1070
    %v1241 = vunpack.c.l.b16 %v1071
    %v1242 = vunpack.c.h.b16 %v1071
    %v1243 = vunpack.c.l.b16 %v1072
    %v1244 = vunpack.c.l.b16 %v1073
    %v1245 = vunpack.c.h.b16 %v1073
    %v1246 = vunpack.c.l.b16 %v1074
    %v1247 = vunpack.c.h.b16 %v1074
    %v1248 = vunpack.c.l.b16 %v1075
    %v1249 = vunpack.c.h.b16 %v1075
    %v1250 = vunpack.c.l.b16 %v1076
    %v1251 = vunpack.c.l.b16 %v1077
    %v1252 = vunpack.c.h.b16 %v1077
    %v1253 = vunpack.c.l.b16 %v1078
    %v1254 = vunpack.c.h.b16 %v1078
    %v1255 = vunpack.c.l.b16 %v1079
    %v1256 = vunpack.c.h.b16 %v1079
    %v1257 = vunpack.c.l.b16 %v1080
    %v1258 = vunpack.c.l.b16 %v1081
    %v1259 = vunpack.c.h.b16 %v1081
    %v1260 = vunpack.c.l.b16 %v1082
    %v1261 = vunpack.c.h.b16 %v1082
    %v1262 = vunpack.c.l.b16 %v1083
    %v1263 = vunpack.c.h.b16 %v1083
    %v1264 = vunpack.c.l.b16 %v1084
    %v1265 = vunpack.c.l.b16 %v1085
    %v1266 = vunpack.c.h.b16 %v1085
    %v1267 = vunpack.c.l.b16 %v1086
    %v1268 = vunpack.c.h.b16 %v1086
    %v1269 = vunpack.c.l.b16 %v1087
    %v1270 = vunpack.c.h.b16 %v1087
    %v1271 = vunpack.c.l.b16 %v1088
    %v1272 = vunpack.c.l.b16 %v1089
    %v1273 = vunpack.c.h.b16 %v1089
    %v1274 = vunpack.c.l.b16 %v1090
    %v1275 = vunpack.c.h.b16 %v1090
    %v1276 = vunpack.c.l.b16 %v1091
    %v1277 = vunpack.c.h.b16 %v1091
    %v1278 = vunpack.c.l.b16 %v1092
    %v1279 = vunpack.c.l.b16 %v1093
    %v1280 = vunpack.c.h.b16 %v1093
    %v1281 = vunpack.c.l.b16 %v1094
    %v1282 = vunpack.c.h.b16 %v1094
    %v1283 = vunpack.c.l.b16 %v1095
    %v1284 = vunpack.c.h.b16 %v1095
    %v1285 = vunpack.c.l.b16 %v1096
    %v1286 = vunpack.c.l.b16 %v1097
    %v1287 = vunpack.c.h.b16 %v1097
    %v1288 = vunpack.c.l.b16 %v1098
    %v1289 = vunpack.c.h.b16 %v1098
    %v1290 = vunpack.c.l.b16 %v1099
    %v1291 = vunpack.c.h.b16 %v1099
    %v1292 = vunpack.c.l.b16 %v1100
    %v1293 = vunpack.c.l.b16 %v1101
    %v1294 = vunpack.c.h.b16 %v1101
    %v1295 = vunpack.c.l.b16 %v1102
    %v1296 = vunpack.c.h.b16 %v1102
    %v1297 = vunpack.c.l.b16 %v1103
    %v1298 = vunpack.c.h.b16 %v1103
    %v1299 = vunpack.c.l.b16 %v1104
    %v1300 = vunpack.c.l.b16 %v1105
    %v1301 = vunpack.c.h.b16 %v1105
    %v1302 = vunpack.c.l.b16 %v1106
    %v1303 = vunpack.c.h.b16 %v1106
    %v1304 = vunpack.c.l.b16 %v1107
    %v1305 = vunpack.c.h.b16 %v1107
    %v1306 = vunpack.c.l.b16 %v1108
    %v1307 = vunpack.c.l.b16 %v1109
    %v1308 = vunpack.c.h.b16 %v1109
    %v1309 = vunpack.c.l.b16 %v1110
    %v1310 = vunpack.c.h.b16 %v1110
    %v1311 = vunpack.c.l.b16 %v1111
    %v1312 = vunpack.c.h.b16 %v1111
    %v1313 = vunpack.c.l.b16 %v1112
    %v1314 = vunpack.c.l.b16 %v1113
    %v1315 = vunpack.c.h.b16 %v1113
    %v1316 = vunpack.c.l.b16 %v1114
    %v1317 = vunpack.c.h.b16 %v1114
    %v1318 = vunpack.c.l.b16 %v1115
    %v1319 = vunpack.c.h.b16 %v1115
    %v1320 = vunpack.c.l.b16 %v1116
    %v1321 = vunpack.c.l.b16 %v1117
    %v1322 = vunpack.c.h.b16 %v1117
    %v1323 = vunpack.c.l.b16 %v1118
    %v1324 = vunpack.c.h.b16 %v1118
    %v1325 = vunpack.c.l.b16 %v1119
    %v1326 = vunpack.c.h.b16 %v1119
    %v1327 = vunpack.c.l.b16 %v1120
    %v1328 = vunpack.c.l.b16 %v1121
    %v1329 = vunpack.c.h.b16 %v1121
    %v1330 = vunpack.c.l.b16 %v1122
    %v1331 = vunpack.c.h.b16 %v1122
    %v1332 = vunpack.c.l.b16 %v1123
    %v1333 = vunpack.c.h.b16 %v1123
    %v1334 = vunpack.c.l.b16 %v1124
    %v1335 = vunpack.c.l.b16 %v1125
    %v1336 = vunpack.c.h.b16 %v1125
    %v1337 = vunpack.c.l.b16 %v1126
    %v1338 = vunpack.c.h.b16 %v1126
    %v1339 = vunpack.c.l.b16 %v1127
    %v1340 = vunpack.c.h.b16 %v1127
    %v1341 = vunpack.c.l.b16 %v1128
    %v1342 = vunpack.c.l.b16 %v1129
    %v1343 = vunpack.c.h.b16 %v1129
    %v1344 = vunpack.c.l.b16 %v1130
    %v1345 = vunpack.c.h.b16 %v1130
    %v1346 = vunpack.c.l.b16 %v1131
    %v1347 = vunpack.c.h.b16 %v1131
    %v1348 = vunpack.c.l.b16 %v1132
    %v1349 = vpack.c.b16 %v1244, %v1237
    %v1350 = vpack.c.b16 %v1245, %v1238
    %v1351 = vpack.c.b16 %v1246, %v1239
    %v1352 = vpack.c.b16 %v1247, %v1240
    %v1353 = vpack.c.b16 %v1248, %v1241
    %v1354 = vpack.c.b16 %v1249, %v1242
    %v1355 = vpack.c.b16 %v1250, %v1243
    %v1356 = vpack.c.b16 %v1258, %v1251
    %v1357 = vpack.c.b16 %v1259, %v1252
    %v1358 = vpack.c.b16 %v1260, %v1253
    %v1359 = vpack.c.b16 %v1261, %v1254
    %v1360 = vpack.c.b16 %v1262, %v1255
    %v1361 = vpack.c.b16 %v1263, %v1256
    %v1362 = vpack.c.b16 %v1264, %v1257
    %v1363 = vpack.c.b16 %v1272, %v1265
    %v1364 = vpack.c.b16 %v1273, %v1266
    %v1365 = vpack.c.b16 %v1274, %v1267
    %v1366 = vpack.c.b16 %v1275, %v1268
    %v1367 = vpack.c.b16 %v1276, %v1269
    %v1368 = vpack.c.b16 %v1277, %v1270
    %v1369 = vpack.c.b16 %v1278, %v1271
    %v1370 = vpack.c.b16 %v1286, %v1279
    %v1371 = vpack.c.b16 %v1287, %v1280
    %v1372 = vpack.c.b16 %v1288, %v1281
    %v1373 = vpack.c.b16 %v1289, %v1282
    %v1374 = vpack.c.b16 %v1290, %v1283
    %v1375 = vpack.c.b16 %v1291, %v1284
    %v1376 = vpack.c.b16 %v1292, %v1285
    %v1377 = vpack.c.b16 %v1300, %v1293
    %v1378 = vpack.c.b16 %v1301, %v1294
    %v1379 = vpack.c.b16 %v1302, %v1295
    %v1380 = vpack.c.b16 %v1303, %v1296
    %v1381 = vpack.c.b16 %v1304, %v1297
    %v1382 = vpack.c.b16 %v1305, %v1298
    %v1383 = vpack.c.b16 %v1306, %v1299
    %v1384 = vpack.c.b16 %v1314, %v1307
    %v1385 = vpack.c.b16 %v1315, %v1308
    %v1386 = vpack.c.b16 %v1316, %v1309
    %v1387 = vpack.c.b16 %v1317, %v1310
    %v1388 = vpack.c.b16 %v1318, %v1311
    %v1389 = vpack.c.b16 %v1319, %v1312
    %v1390 = vpack.c.b16 %v1320, %v1313
    %v1391 = vpack.c.b16 %v1328, %v1321
    %v1392 = vpack.c.b16 %v1329, %v1322
    %v1393 = vpack.c.b16 %v1330, %v1323
    %v1394 = vpack.c.b16 %v1331, %v1324
    %v1395 = vpack.c.b16 %v1332, %v1325
    %v1396 = vpack.c.b16 %v1333, %v1326
    %v1397 = vpack.c.b16 %v1334, %v1327
    %v1398 = vpack.c.b16 %v1342, %v1335
    %v1399 = vpack.c.b16 %v1343, %v1336
    %v1400 = vpack.c.b16 %v1344, %v1337
    %v1401 = vpack.c.b16 %v1345, %v1338
    %v1402 = vpack.c.b16 %v1346, %v1339
    %v1403 = vpack.c.b16 %v1347, %v1340
    %v1404 = vpack.c.b16 %v1348, %v1341
    %1461 = vmatprep.subr.bf16.mxu0 %v1399
    %1462 = vmatpush1.bf16.msra.mxu0 %v1398
    %1463 = vmatprep.subr.bf16.mxu0 %v1392
    %1464 = vmatpush1.bf16.msra.mxu0 %v1391
    %1465 = vmatprep.subr.bf16.mxu0 %v1385
    %1466 = vmatpush1.bf16.msra.mxu0 %v1384
    %1467 = vmatprep.subr.bf16.mxu0 %v1378
    %1468 = vmatpush1.bf16.msra.mxu0 %v1377
    %1469 = vmatprep.subr.bf16.mxu0 %v1371
    %1470 = vmatpush1.bf16.msra.mxu0 %v1370
    %1471 = vmatprep.subr.bf16.mxu0 %v1364
    %1472 = vmatpush1.bf16.msra.mxu0 %v1363
    %1473 = vmatprep.subr.bf16.mxu0 %v1357
    %1474 = vmatpush1.bf16.msra.mxu0 %v1356
    %1475 = vmatprep.subr.bf16.mxu0 %v1350
    %1476 = vmatpush1.bf16.msra.mxu0 %v1349
    %1477 = vmatprep.subr.bf16.mxu0 0
    %1478 = vmatpush2.bf16.msra.mxu0 0
    %1479 = vmatprep.subr.bf16.mxu0 0
    %1480 = vmatpush2.bf16.msra.mxu0 0
    %1481 = vmatprep.subr.bf16.mxu0 0
    %1482 = vmatpush2.bf16.msra.mxu0 0
    %1483 = vmatprep.subr.bf16.mxu0 0
    %1484 = vmatpush2.bf16.msra.mxu0 0
    %1485 = vmatprep.subr.bf16.mxu0 0
    %1486 = vmatpush2.bf16.msra.mxu0 0
    %1487 = vmatprep.subr.bf16.mxu0 0
    %1488 = vmatpush2.bf16.msra.mxu0 0
    %1489 = vmatprep.subr.bf16.mxu0 0
    %1490 = vmatpush2.bf16.msra.mxu0 0
    %1491 = vmatprep.subr.bf16.mxu0 0
    %1492 = vmatpush2.bf16.msra.mxu0 0
    %1493 = vmatprep.mubr.bf16.mxu0 0
    %1494 = vmatmul.mubr.bf16.gmra.mxu0 %v1068
    %v1495 = vpop.f32.mrf.mxu0
    %v1496 = vadd.f32 %v1141, %v1495
    %v1497 = vpop.f32.mrf.mxu0
    %v1498 = vadd.f32 %v1145, %v1497
    %v1499 = vpop.f32.mrf.mxu0
    %v1500 = vadd.f32 %v1141, %v1499
    %v1501 = vpop.f32.mrf.mxu0
    %v1502 = vadd.f32 %v1145, %v1501
    %1503 = vdwg.mxu0
    %1504 = vmatprep.subr.bf16.mxu0 %v1401
    %1505 = vmatpush1.bf16.msra.mxu0 %v1400
    %1506 = vmatprep.subr.bf16.mxu0 %v1394
    %1507 = vmatpush1.bf16.msra.mxu0 %v1393
    %1508 = vmatprep.subr.bf16.mxu0 %v1387
    %1509 = vmatpush1.bf16.msra.mxu0 %v1386
    %1510 = vmatprep.subr.bf16.mxu0 %v1380
    %1511 = vmatpush1.bf16.msra.mxu0 %v1379
    %1512 = vmatprep.subr.bf16.mxu0 %v1373
    %1513 = vmatpush1.bf16.msra.mxu0 %v1372
    %1514 = vmatprep.subr.bf16.mxu0 %v1366
    %1515 = vmatpush1.bf16.msra.mxu0 %v1365
    %1516 = vmatprep.subr.bf16.mxu0 %v1359
    %1517 = vmatpush1.bf16.msra.mxu0 %v1358
    %1518 = vmatprep.subr.bf16.mxu0 %v1352
    %1519 = vmatpush1.bf16.msra.mxu0 %v1351
    %1520 = vmatprep.subr.bf16.mxu0 0
    %1521 = vmatpush2.bf16.msra.mxu0 0
    %1522 = vmatprep.subr.bf16.mxu0 0
    %1523 = vmatpush2.bf16.msra.mxu0 0
    %1524 = vmatprep.subr.bf16.mxu0 0
    %1525 = vmatpush2.bf16.msra.mxu0 0
    %1526 = vmatprep.subr.bf16.mxu0 0
    %1527 = vmatpush2.bf16.msra.mxu0 0
    %1528 = vmatprep.subr.bf16.mxu0 0
    %1529 = vmatpush2.bf16.msra.mxu0 0
    %1530 = vmatprep.subr.bf16.mxu0 0
    %1531 = vmatpush2.bf16.msra.mxu0 0
    %1532 = vmatprep.subr.bf16.mxu0 0
    %1533 = vmatpush2.bf16.msra.mxu0 0
    %1534 = vmatprep.subr.bf16.mxu0 0
    %1535 = vmatpush2.bf16.msra.mxu0 0
    %1536 = vmatprep.mubr.bf16.mxu0 0
    %1537 = vmatmul.mubr.bf16.gmra.mxu0 %v1068
    %v1538 = vpop.f32.mrf.mxu0
    %v1539 = vadd.f32 %v1149, %v1538
    %v1540 = vpop.f32.mrf.mxu0
    %v1541 = vadd.f32 %v1153, %v1540
    %v1542 = vpop.f32.mrf.mxu0
    %v1543 = vadd.f32 %v1149, %v1542
    %v1544 = vpop.f32.mrf.mxu0
    %v1545 = vadd.f32 %v1153, %v1544
    %1546 = vdwg.mxu0
    %1547 = vmatprep.subr.bf16.mxu0 %v1403
    %1548 = vmatpush1.bf16.msra.mxu0 %v1402
    %1549 = vmatprep.subr.bf16.mxu0 %v1396
    %1550 = vmatpush1.bf16.msra.mxu0 %v1395
    %1551 = vmatprep.subr.bf16.mxu0 %v1389
    %1552 = vmatpush1.bf16.msra.mxu0 %v1388
    %1553 = vmatprep.subr.bf16.mxu0 %v1382
    %1554 = vmatpush1.bf16.msra.mxu0 %v1381
    %1555 = vmatprep.subr.bf16.mxu0 %v1375
    %1556 = vmatpush1.bf16.msra.mxu0 %v1374
    %1557 = vmatprep.subr.bf16.mxu0 %v1368
    %1558 = vmatpush1.bf16.msra.mxu0 %v1367
    %1559 = vmatprep.subr.bf16.mxu0 %v1361
    %1560 = vmatpush1.bf16.msra.mxu0 %v1360
    %1561 = vmatprep.subr.bf16.mxu0 %v1354
    %1562 = vmatpush1.bf16.msra.mxu0 %v1353
    %1563 = vmatprep.subr.bf16.mxu0 0
    %1564 = vmatpush2.bf16.msra.mxu0 0
    %1565 = vmatprep.subr.bf16.mxu0 0
    %1566 = vmatpush2.bf16.msra.mxu0 0
    %1567 = vmatprep.subr.bf16.mxu0 0
    %1568 = vmatpush2.bf16.msra.mxu0 0
    %1569 = vmatprep.subr.bf16.mxu0 0
    %1570 = vmatpush2.bf16.msra.mxu0 0
    %1571 = vmatprep.subr.bf16.mxu0 0
    %1572 = vmatpush2.bf16.msra.mxu0 0
    %1573 = vmatprep.subr.bf16.mxu0 0
    %1574 = vmatpush2.bf16.msra.mxu0 0
    %1575 = vmatprep.subr.bf16.mxu0 0
    %1576 = vmatpush2.bf16.msra.mxu0 0
    %1577 = vmatprep.subr.bf16.mxu0 0
    %1578 = vmatpush2.bf16.msra.mxu0 0
    %1579 = vmatprep.mubr.bf16.mxu0 0
    %1580 = vmatmul.mubr.bf16.gmra.mxu0 %v1068
    %v1581 = vpop.f32.mrf.mxu0
    %v1582 = vadd.f32 %v1157, %v1581
    %v1583 = vpop.f32.mrf.mxu0
    %v1584 = vadd.f32 %v1161, %v1583
    %v1585 = vpop.f32.mrf.mxu0
    %v1586 = vadd.f32 %v1157, %v1585
    %v1587 = vpop.f32.mrf.mxu0
    %v1588 = vadd.f32 %v1161, %v1587
    %1589 = vdwg.mxu0
    %1590 = vmatprep.subr.bf16.mxu0 0
    %1591 = vmatpush1.bf16.msra.mxu0 %v1404
    %1592 = vmatprep.subr.bf16.mxu0 0
    %1593 = vmatpush1.bf16.msra.mxu0 %v1397
    %1594 = vmatprep.subr.bf16.mxu0 0
    %1595 = vmatpush1.bf16.msra.mxu0 %v1390
    %1596 = vmatprep.subr.bf16.mxu0 0
    %1597 = vmatpush1.bf16.msra.mxu0 %v1383
    %1598 = vmatprep.subr.bf16.mxu0 0
    %1599 = vmatpush1.bf16.msra.mxu0 %v1376
    %1600 = vmatprep.subr.bf16.mxu0 0
    %1601 = vmatpush1.bf16.msra.mxu0 %v1369
    %1602 = vmatprep.subr.bf16.mxu0 0
    %1603 = vmatpush1.bf16.msra.mxu0 %v1362
    %1604 = vmatprep.subr.bf16.mxu0 0
    %1605 = vmatpush1.bf16.msra.mxu0 %v1355
    %1606 = vmatprep.subr.bf16.mxu0 0
    %1607 = vmatpush2.bf16.msra.mxu0 0
    %1608 = vmatprep.subr.bf16.mxu0 0
    %1609 = vmatpush2.bf16.msra.mxu0 0
    %1610 = vmatprep.subr.bf16.mxu0 0
    %1611 = vmatpush2.bf16.msra.mxu0 0
    %1612 = vmatprep.subr.bf16.mxu0 0
    %1613 = vmatpush2.bf16.msra.mxu0 0
    %1614 = vmatprep.subr.bf16.mxu0 0
    %1615 = vmatpush2.bf16.msra.mxu0 0
    %1616 = vmatprep.subr.bf16.mxu0 0
    %1617 = vmatpush2.bf16.msra.mxu0 0
    %1618 = vmatprep.subr.bf16.mxu0 0
    %1619 = vmatpush2.bf16.msra.mxu0 0
    %1620 = vmatprep.subr.bf16.mxu0 0
    %1621 = vmatpush2.bf16.msra.mxu0 0
    %1622 = vmatprep.mubr.bf16.mxu0 0
    %1623 = vmatmul.mubr.bf16.gmra.mxu0 %v1068
    %v1624 = vpop.f32.mrf.mxu0
    %v1625 = vadd.f32 %v1165, %v1624
    %v1626 = vpop.f32.mrf.mxu0
    %v1627 = vpop.f32.mrf.mxu0
    %v1628 = vadd.f32 %v1165, %v1627
    %v1629 = vpop.f32.mrf.mxu0
    %1630 = vdwg.mxu0
    %v1631 = vxor.u32 %v1496, 2147483648
    %v1632 = vxor.u32 %v1498, 2147483648
    %v1633 = vxor.u32 %v1539, 2147483648
    %v1634 = vxor.u32 %v1541, 2147483648
    %v1635 = vxor.u32 %v1582, 2147483648
    %v1636 = vxor.u32 %v1584, 2147483648
    %v1637 = vxor.u32 %v1625, 2147483648
    %v1638 = vxor.u32 %v1500, 2147483648
    %v1639 = vxor.u32 %v1502, 2147483648
    %v1640 = vxor.u32 %v1543, 2147483648
    %v1641 = vxor.u32 %v1545, 2147483648
    %v1642 = vxor.u32 %v1586, 2147483648
    %v1643 = vxor.u32 %v1588, 2147483648
    %v1644 = vxor.u32 %v1628, 2147483648
    %v1645 = vmul.f32 %v1631, 1.442695
    %v1646 = vpow.pop %v1645
    %v1647 = vmul.f32 %v1632, 1.442695
    %v1648 = vpow.pop %v1647
    %v1649 = vmul.f32 %v1633, 1.442695
    %v1650 = vpow.pop %v1649
    %v1651 = vmul.f32 %v1634, 1.442695
    %v1652 = vpow.pop %v1651
    %v1653 = vmul.f32 %v1635, 1.442695
    %v1654 = vpow.pop %v1653
    %v1655 = vmul.f32 %v1636, 1.442695
    %v1656 = vpow.pop %v1655
    %v1657 = vmul.f32 %v1637, 1.442695
    %v1658 = vpow.pop %v1657
    %v1659 = vmul.f32 %v1638, 1.442695
    %v1660 = vpow.pop %v1659
    %v1661 = vmul.f32 %v1639, 1.442695
    %v1662 = vpow.pop %v1661
    %v1663 = vmul.f32 %v1640, 1.442695
    %v1664 = vpow.pop %v1663
    %v1665 = vmul.f32 %v1641, 1.442695
    %v1666 = vpow.pop %v1665
    %v1667 = vmul.f32 %v1642, 1.442695
    %v1668 = vpow.pop %v1667
    %v1669 = vmul.f32 %v1643, 1.442695
    %v1670 = vpow.pop %v1669
    %v1671 = vmul.f32 %v1644, 1.442695
    %v1672 = vpow.pop %v1671
    %v1673 = vadd.f32 %v1646, 1.0
    %v1674 = vadd.f32 %v1648, 1.0
    %v1675 = vadd.f32 %v1650, 1.0
    %v1676 = vadd.f32 %v1652, 1.0
    %v1677 = vadd.f32 %v1654, 1.0
    %v1678 = vadd.f32 %v1656, 1.0
    %v1679 = vadd.f32 %v1658, 1.0
    %v1680 = vadd.f32 %v1660, 1.0
    %v1681 = vadd.f32 %v1662, 1.0
    %v1682 = vadd.f32 %v1664, 1.0
    %v1683 = vadd.f32 %v1666, 1.0
    %v1684 = vadd.f32 %v1668, 1.0
    %v1685 = vadd.f32 %v1670, 1.0
    %v1686 = vadd.f32 %v1672, 1.0
    %v1687 = vrcp.pop %v1673
    %v1688 = vmul.f32 1.0, %v1687
    %v1689 = vrcp.pop %v1674
    %v1690 = vmul.f32 1.0, %v1689
    %v1691 = vrcp.pop %v1675
    %v1692 = vmul.f32 1.0, %v1691
    %v1693 = vrcp.pop %v1676
    %v1694 = vmul.f32 1.0, %v1693
    %v1695 = vrcp.pop %v1677
    %v1696 = vmul.f32 1.0, %v1695
    %v1697 = vrcp.pop %v1678
    %v1698 = vmul.f32 1.0, %v1697
    %v1699 = vrcp.pop %v1679
    %v1700 = vmul.f32 1.0, %v1699
    %v1701 = vrcp.pop %v1680
    %v1702 = vmul.f32 1.0, %v1701
    %v1703 = vrcp.pop %v1681
    %v1704 = vmul.f32 1.0, %v1703
    %v1705 = vrcp.pop %v1682
    %v1706 = vmul.f32 1.0, %v1705
    %v1707 = vrcp.pop %v1683
    %v1708 = vmul.f32 1.0, %v1707
    %v1709 = vrcp.pop %v1684
    %v1710 = vmul.f32 1.0, %v1709
    %v1711 = vrcp.pop %v1685
    %v1712 = vmul.f32 1.0, %v1711
    %v1713 = vrcp.pop %v1686
    %v1714 = vmul.f32 1.0, %v1713
    %1715 = vst [vmem:[#allocation2] sm:$0xff] %v1688
    %1716 = vst [vmem:[#allocation2 + $0x8] sm:$0xff] %v1690
    %1717 = vst [vmem:[#allocation2 + $0x10] sm:$0xff] %v1692
    %1718 = vst [vmem:[#allocation2 + $0x18] sm:$0xff] %v1694
    %1719 = vst [vmem:[#allocation2 + $0x20] sm:$0xff] %v1696
    %1720 = vst [vmem:[#allocation2 + $0x28] sm:$0xff] %v1698
    %1721 = vst.msk [vmem:[#allocation2 + $0x30] sm:$0xff] %vm453, %v1700
    %1722 = vst [vmem:[#allocation2 + $0x38] sm:$0xff] %v1702
    %1723 = vst [vmem:[#allocation2 + $0x40] sm:$0xff] %v1704
    %1724 = vst [vmem:[#allocation2 + $0x48] sm:$0xff] %v1706
    %1725 = vst [vmem:[#allocation2 + $0x50] sm:$0xff] %v1708
    %1726 = vst [vmem:[#allocation2 + $0x58] sm:$0xff] %v1710
    %1727 = vst [vmem:[#allocation2 + $0x60] sm:$0xff] %v1712
    %1728 = vst.msk [vmem:[#allocation2 + $0x68] sm:$0xff] %vm453, %v1714
    // Predicated region
    $region42: #{tpu_custom_call.1} parent=1 // pred_check
      _
    $region43: #{tpu_custom_call.1} parent=1 // pred_check_branch
      %1730 = sbr.rel (0) target = $region45
    $region44: #{tpu_custom_call.1} parent=1 // pred_region
      _
    $region45: #{tpu_custom_call.1} parent=1 // pred_fallthru
      _
    // Predicated region
    $region46: #{tpu_custom_call.1} parent=1 // pred_check
      _
    $region47: #{tpu_custom_call.1} parent=1 // pred_check_branch
      %1732 = sbr.rel (0) target = $region49
    $region48: #{tpu_custom_call.1} parent=1 // pred_region
      %s1734 = ssub.s32 1792, 1792
      %1735 = vsyncadd [#allocation3], %s1734
      %s1736 = sshll.u32 [#allocation2], 4
      %s1737 = int_to_ptr.vmem [resolvable:$true] %s1736
      %1742 = dma.vmem_to_hbm [thread:$0]  %s1737, 1792, %s11, [#allocation3], 896, 896, 56
    $region49: #{tpu_custom_call.1} parent=1 // pred_fallthru
      _
    // Predicated region
    $region50: #{tpu_custom_call.1} parent=1 // pred_check
      _
    $region51: #{tpu_custom_call.1} parent=1 // pred_check_branch
      %1744 = sbr.rel (0) target = $region53
    $region52: #{tpu_custom_call.1} parent=1 // pred_region
      _
    $region53: #{tpu_custom_call.1} parent=1 // pred_fallthru
      _
    // Predicated region
    $region54: #{tpu_custom_call.1} parent=1 // pred_check
      _
    $region55: #{tpu_custom_call.1} parent=1 // pred_check_branch
      %1746 = sbr.rel (0) target = $region57
    $region56: #{tpu_custom_call.1} parent=1 // pred_region
      %1747 = dma.done [#allocation3], 1792
    $region57: #{tpu_custom_call.1} parent=1 // pred_fallthru
      _
    %1748 = vsyncpa [#allocation3], 1

</llo_original>
